<compile_context>
chip_gen: v7x
topology: tpu7x:2x2x1
jax: 0.10.0
libtpu: 0.0.40
codegen_flags: <defaults>
</compile_context>

<pallas_src>
import functools

import jax
import jax.numpy as jnp
from jax.experimental import pallas as pl
from jax.experimental.pallas import tpu as pltpu


# ---------------------------------------------------------------------------
# helpers
# ---------------------------------------------------------------------------
def _round_up(x, m):
    return (x + m - 1) // m * m


# ---------------------------------------------------------------------------
# Pallas kernels
# ---------------------------------------------------------------------------
def conv_block_kernel(x_ref, w1_ref, b1_ref, v2_ref, b2_ref, o_ref, p_buf,
                      *, l4, l4p):
    """Fused conv1+BN+ReLU+pool + conv2+BN+ReLU+pool for one batch element.

    x_ref : (1, l4p, 48)   bf16  quad patches (12 taps x 4 channels per row)
    w1_ref: (48, 1024)     bf16  conv1 quad weights, column blocks ordered
                                 [pos0 | pos2 | pos1 | pos3] so MaxPool(2)
                                 partners sit in opposite 512-column halves
    b1_ref: (1, 1024)      f32   folded BN1 bias (tiled x4)
    v2_ref: (3, 512, 256)  bf16  conv2 halo weight stack (paired layout)
    b2_ref: (1, 256)       f32   folded BN2 bias (tiled x2)
    o_ref : (1, l4p, 128)  bf16  pooled conv2 output, time-major
    p_buf : (l4p+2, 512)   f32   VMEM scratch: pooled conv1 pairs + zero halos
    """
    # ---- layer 1: one K=48 MXU dot covers 4 output positions per row -------
    y = jnp.dot(x_ref[0], w1_ref[...], preferred_element_type=jnp.float32)
    y = jnp.maximum(y + b1_ref[...], 0.0)                      # (l4p, 1024)
    # MaxPool1d(2): halves are [pos0|pos2] vs [pos1|pos3] -> elementwise max
    pair = jnp.maximum(y[:, :512], y[:, 512:])                  # (l4p, 512)
    if l4p > l4:
        # zero the padded time rows so the conv2 right halo matches PyTorch's
        # zero padding (rows >= l4 only feed zero fc1 weight rows afterwards).
        row = jax.lax.broadcasted_iota(jnp.int32, (l4p, 1), 0)
        pair = jnp.where(row < l4, pair, 0.0)

    # ---- stage pairs into the halo buffer (rows 0 / l4p+1 = conv2 zero pad)
    p_buf[0:1, :] = jnp.zeros((1, 512), jnp.float32)
    p_buf[l4p + 1:l4p + 2, :] = jnp.zeros((1, 512), jnp.float32)
    p_buf[1:l4p + 1, :] = pair

    # ---- layer 2: 3 shifted K=512 dots against the halo weight stack -------
    acc = jnp.zeros((l4p, 256), jnp.float32)
    for j in range(3):                                           # static unroll
        lhs = p_buf[j:j + l4p, :].astype(jnp.bfloat16)
        acc = acc + jnp.dot(lhs, v2_ref[j],
                            preferred_element_type=jnp.float32)
    z = jnp.maximum(acc + b2_ref[...], 0.0)                      # (l4p, 256)
    # MaxPool1d(2): even/odd conv2 rows live in the two 128-column halves.
    o_ref[0] = jnp.maximum(z[:, :128], z[:, 128:]).astype(o_ref.dtype)


def mlp_head_kernel(x_ref, w1_ref, b1_ref, w2_ref, b2_ref, o_ref, acc_ref):
    """fc1 (tiled reduction) + ReLU + (Dropout=identity) + fc2 + sigmoid.

    x_ref: (TB, TF) bf16, w1_ref: (TF, 128) bf16, b1_ref: (1, 128) f32,
    w2_ref: (1, 128) f32, b2_ref: (1, 1) f32, o_ref: (TB, 1) f32,
    acc_ref: (TB, 128) f32 VMEM accumulator (output resident across j).
    """
    j = pl.program_id(1)

    @pl.when(j == 0)
    def _():
        acc_ref[...] = jnp.zeros_like(acc_ref)

    acc_ref[...] += jnp.dot(x_ref[...], w1_ref[...],
                            preferred_element_type=jnp.float32)

    @pl.when(j == pl.num_programs(1) - 1)
    def _():
        h = jnp.maximum(acc_ref[...] + b1_ref[...], 0.0)
        # fc2 has a single output column -> VPU/XLU reduction, MXU stays free.
        z = jnp.sum(h * w2_ref[...], axis=-1, keepdims=True) + b2_ref[...]
        o_ref[...] = jax.nn.sigmoid(z)


# ---------------------------------------------------------------------------
# Pallas wrappers
# ---------------------------------------------------------------------------
def conv_block(xw, w1q, b1t, v2, b2t, *, l4):
    """xw: (B, l4p, 48) bf16 quad patches -> (B, l4p, 128) bf16 pooled conv2."""
    bsz, l4p, _ = xw.shape
    kernel = functools.partial(conv_block_kernel, l4=l4, l4p=l4p)
    return pl.pallas_call(
        kernel,
        out_shape=jax.ShapeDtypeStruct((bsz, l4p, 128), jnp.bfloat16),
        grid=(bsz,),
        in_specs=[
            pl.BlockSpec((1, l4p, 48), lambda b: (b, 0, 0)),
            pl.BlockSpec((48, 1024), lambda b: (0, 0)),        # resident weights
            pl.BlockSpec((1, 1024), lambda b: (0, 0)),
            pl.BlockSpec((3, 512, 256), lambda b: (0, 0, 0)),  # resident weights
            pl.BlockSpec((1, 256), lambda b: (0, 0)),
        ],
        out_specs=pl.BlockSpec((1, l4p, 128), lambda b: (b, 0, 0)),
        scratch_shapes=[pltpu.VMEM((l4p + 2, 512), jnp.float32)],
        compiler_params=pltpu.CompilerParams(
            dimension_semantics=("parallel",)),
    )(xw, w1q, b1t, v2, b2t)


def mlp_head(x, w1, b1, w2, b2):
    """x: (B, F) bf16 (F multiple of 1024) -> (B, 1) f32 probabilities."""
    bsz, f = x.shape
    h = w1.shape[1]
    tf = f
    for cand in (4096, 2048, 1024):                 # full-depth reduction tiles
        if f % cand == 0:
            tf = cand
            break
    # ~ceil(B/2) -> at most 2 batch tiles: both v7x TCs busy, fc1_w streamed
    # at most twice (single tile for tiny batches).
    tb = min(512, _round_up(max(1, -(-bsz // 2)), 8))
    b_pad = _round_up(bsz, tb)
    if b_pad != bsz:
        x = jnp.pad(x, ((0, b_pad - bsz), (0, 0)))
    out = pl.pallas_call(
        mlp_head_kernel,
        out_shape=jax.ShapeDtypeStruct((b_pad, 1), jnp.float32),
        grid=(b_pad // tb, f // tf),
        in_specs=[
            pl.BlockSpec((tb, tf), lambda i, j: (i, j)),
            pl.BlockSpec((tf, h), lambda i, j: (j, 0)),
            pl.BlockSpec((1, h), lambda i, j: (0, 0)),
            pl.BlockSpec((1, h), lambda i, j: (0, 0)),
            pl.BlockSpec((1, 1), lambda i, j: (0, 0)),
        ],
        out_specs=pl.BlockSpec((tb, 1), lambda i, j: (i, 0)),
        scratch_shapes=[pltpu.VMEM((tb, h), jnp.float32)],
        compiler_params=pltpu.CompilerParams(
            dimension_semantics=("parallel", "arbitrary")),
    )(x, w1, b1, w2, b2)
    return out[:bsz] if b_pad != bsz else out


# ---------------------------------------------------------------------------
# One-time weight preparation (hoisted out of the jitted forward)
# ---------------------------------------------------------------------------
def fold_bn(conv_b, gamma, beta, rm, rv, eps=1e-5):
    scale = gamma / jnp.sqrt(rv + eps)
    bias = (conv_b - rm) * scale + beta
    return scale, bias


def _conv2_halo_weights(conv2_w, scale):
    """(Cout=128, Cin=256, K=5) + BN scale -> (3, 512, 256) paired halo stack."""
    w = jnp.transpose(conv2_w, (2, 1, 0)) * scale[None, None, :]   # (5, 256, 128)
    z = jnp.zeros_like(w[0])

    def blk(tl, tr, bl, br):
        return jnp.concatenate([jnp.concatenate([tl, tr], axis=1),
                                jnp.concatenate([bl, br], axis=1)], axis=0)

    v = jnp.stack([blk(w[0], z, w[1], w[0]),
                   blk(w[2], w[1], w[3], w[2]),
                   blk(w[4], w[3], z, w[4])])
    return v.astype(jnp.bfloat16)


def prepare_params(p, seq_length):
    """Fold BN, build the quad / halo weight stacks and the permuted fc1 matrix.

    Run ONCE at model-load time (not inside the per-call jitted forward)."""
    assert seq_length % 4 == 0, "seqLength must be divisible by 4"
    l4 = seq_length // 4
    l4p = _round_up(l4, 8)          # padded time length (garbage rows masked)

    # layer 1: quad weights -- 4 output positions per patch row, column blocks
    # ordered [pos0 | pos2 | pos1 | pos3] so pooling partners are lane halves.
    s1, b1f = fold_bn(p["conv1_b"], p["bn1_g"], p["bn1_b"],
                      p["bn1_rm"], p["bn1_rv"])
    w1s = jnp.transpose(p["conv1_w"] * s1[:, None, None], (2, 1, 0))  # (7,4,256)
    w1q = jnp.zeros((12, 4, 4 * 256), jnp.float32)
    for m, q in enumerate((0, 2, 1, 3)):
        w1q = w1q.at[q:q + 7, :, m * 256:(m + 1) * 256].set(w1s)
    w1q = w1q.reshape(48, 1024).astype(jnp.bfloat16)
    b1t = jnp.tile(b1f, 4)[None, :].astype(jnp.float32)               # (1, 1024)

    # layer 2: paired halo stack (even/odd conv2 rows in the column halves).
    s2, b2f = fold_bn(p["conv2_b"], p["bn2_g"], p["bn2_b"],
                      p["bn2_rm"], p["bn2_rv"])
    v2 = _conv2_halo_weights(p["conv2_w"], s2)                        # (3,512,256)
    b2t = jnp.tile(b2f, 2)[None, :].astype(jnp.float32)               # (1, 256)

    # head: fold PyTorch's channel-major flatten into fc1 and zero-pad the
    # rows for the padded time positions (garbage activations x 0 = 0).
    w1m = p["fc1_w"].reshape(128, 128, l4).transpose(2, 1, 0) \
                    .reshape(l4 * 128, 128)
    w1m = jnp.pad(w1m, ((0, (l4p - l4) * 128), (0, 0))).astype(jnp.bfloat16)

    return {
        "w1q": w1q, "b1t": b1t, "v2": v2, "b2t": b2t, "w1m": w1m,
        "b1_fc": p["fc1_b"][None, :].astype(jnp.float32),
        "w2_fc": p["fc2_w"].reshape(1, 128).astype(jnp.float32),
        "b2_fc": p["fc2_b"].reshape(1, 1).astype(jnp.float32),
    }


# ---------------------------------------------------------------------------
# Forward pass (jit this; `prep` comes from prepare_params)
# ---------------------------------------------------------------------------
def promoter_cnn_forward(x, prep):
    """x: (B, seqLength, 4) f32 -> (B, 1) sigmoid probabilities."""
    bsz, l, cin = x.shape
    assert cin == 4 and l % 4 == 0
    l4 = l // 4
    l4p = prep["w1m"].shape[0] // 128

    # Single fused gather: pad (conv1 pad=3 left, zeros right up to the padded
    # time length), cast bf16, and emit quad patches -- row u holds the 12x4
    # window shared by conv1 outputs 4u..4u+3 (= conv2 pair row u).
    total = 4 * l4p + 8
    xp = jnp.pad(x, ((0, 0), (3, total - 3 - l), (0, 0))).astype(jnp.bfloat16)
    xq = xp.reshape(bsz, l4p + 2, 16)
    xw = jnp.concatenate([xq[:, 0:l4p], xq[:, 1:l4p + 1], xq[:, 2:l4p + 2]],
                         axis=2)                                  # (B, l4p, 48)

    # fused conv1 -> pool -> conv2 -> pool (per batch element, all in VMEM)
    y2 = conv_block(xw, prep["w1q"], prep["b1t"], prep["v2"], prep["b2t"],
                    l4=l4)                                        # (B, l4p, 128)

    # flatten (time-major; the channel-major permutation is folded into w1m,
    # and the padded time rows meet zero weight rows) + MLP head.
    flat = y2.reshape(bsz, l4p * 128)
    return mlp_head(flat, prep["w1m"], prep["b1_fc"],
                    prep["w2_fc"], prep["b2_fc"])


# ---------------------------------------------------------------------------
# Pure-JAX f32 reference (for verification)
# ---------------------------------------------------------------------------
def reference_forward(x, p, eps=1e-5):
    def conv1d(xin, w, b, pad):
        y = jax.lax.conv_general_dilated(
            xin, w, window_strides=(1,), padding=[(pad, pad)],
            dimension_numbers=("NCH", "OIH", "NCH"))
        return y + b[None, :, None]

    def bn(y, g, be, rm, rv):
        return (y - rm[None, :, None]) * (g / jnp.sqrt(rv + eps))[None, :, None] \
            + be[None, :, None]

    xc = jnp.transpose(x, (0, 2, 1))
    y = jnp.maximum(bn(conv1d(xc, p["conv1_w"], p["conv1_b"], 3),
                       p["bn1_g"], p["bn1_b"], p["bn1_rm"], p["bn1_rv"]), 0.0)
    B, C, L = y.shape
    y = y.reshape(B, C, L // 2, 2).max(-1)
    y = jnp.maximum(bn(conv1d(y, p["conv2_w"], p["conv2_b"], 2),
                       p["bn2_g"], p["bn2_b"], p["bn2_rm"], p["bn2_rv"]), 0.0)
    B, C, L = y.shape
    y = y.reshape(B, C, L // 2, 2).max(-1)
    flat = y.reshape(B, -1)
    h = jnp.maximum(flat @ p["fc1_w"].T + p["fc1_b"], 0.0)
    return jax.nn.sigmoid(h @ p["fc2_w"].T + p["fc2_b"])


# ---------------------------------------------------------------------------
# Deterministic synthetic parameters
# ---------------------------------------------------------------------------
def init_params(seq_length, key):
    ks = jax.random.split(key, 20)
    n = lambda k, s, sc=0.1: sc * jax.random.normal(k, s, dtype=jnp.float32)
    f_in = 128 * (seq_length // 4)
    return {
        "conv1_w": n(ks[0], (256, 4, 7)),
        "conv1_b": n(ks[1], (256,)),
        "bn1_g": 1.0 + n(ks[2], (256,)),
        "bn1_b": n(ks[3], (256,)),
        "bn1_rm": n(ks[4], (256,)),
        "bn1_rv": 1.0 + 0.1 * jnp.abs(jax.random.normal(ks[5], (256,), jnp.float32)),
        "conv2_w": n(ks[6], (128, 256, 5)),
        "conv2_b": n(ks[7], (128,)),
        "bn2_g": 1.0 + n(ks[8], (128,)),
        "bn2_b": n(ks[9], (128,)),
        "bn2_rm": n(ks[10], (128,)),
        "bn2_rv": 1.0 + 0.1 * jnp.abs(jax.random.normal(ks[11], (128,), jnp.float32)),
        "fc1_w": n(ks[12], (128, f_in)),
        "fc1_b": n(ks[13], (128,)),
        "fc2_w": n(ks[14], (1, 128)),
        "fc2_b": n(ks[15], (1,)),
    }


if __name__ == "__main__":
    B, SEQ_LEN = 2, 16  # small shapes; seqLength divisible by 4
    key = jax.random.PRNGKey(0)
    k_x, k_p = jax.random.split(key)
    x = jax.random.normal(k_x, (B, SEQ_LEN, 4), dtype=jnp.float32)
    params = init_params(SEQ_LEN, k_p)

    prep = prepare_params(params, SEQ_LEN)          # one-time, outside jit
    fwd = jax.jit(promoter_cnn_forward)
    out = jax.block_until_ready(fwd(x, prep))

    ref = reference_forward(x, params)
    assert out.shape == (B, 1)
    # bf16 MXU operands (f32 accumulation) -> loose tolerance vs the f32 ref.
    assert jnp.allclose(out, ref, atol=2e-2, rtol=2e-2), (out, ref)
    print("KERNEL_OK")
</pallas_src>

<mosaic_0001>
module attributes {stable_mosaic.version = 11 : i64} {
  func.func @conv_block_kernel(%arg0: i32, %arg1: memref<1x8x48xbf16, #tpu.memory_space<vmem>>, %arg2: memref<48x1024xbf16, #tpu.memory_space<vmem>>, %arg3: memref<1x1024xf32, #tpu.memory_space<vmem>>, %arg4: memref<3x512x256xbf16, #tpu.memory_space<vmem>>, %arg5: memref<1x256xf32, #tpu.memory_space<vmem>>, %arg6: memref<1x8x128xbf16, #tpu.memory_space<vmem>>, %arg7: memref<10x512xf32, #tpu.memory_space<vmem>>) attributes {dimension_semantics = [#tpu.dimension_semantics<parallel>], iteration_bounds = array<i64: 2>, scalar_prefetch = 0 : i64, scratch_operands = 1 : i64, tpu.core_type = #tpu.core_type<tc>, window_params = [{transform_indices = @transform_0, window_bounds = array<i64: 1, 8, 48>}, {pipeline_mode = #tpu.pipeline_mode<synchronous>, transform_indices = @transform_1, window_bounds = array<i64: 48, 1024>}, {pipeline_mode = #tpu.pipeline_mode<synchronous>, transform_indices = @transform_2, window_bounds = array<i64: 1, 1024>}, {pipeline_mode = #tpu.pipeline_mode<synchronous>, transform_indices = @transform_3, window_bounds = array<i64: 3, 512, 256>}, {pipeline_mode = #tpu.pipeline_mode<synchronous>, transform_indices = @transform_4, window_bounds = array<i64: 1, 256>}, {transform_indices = @transform_5, window_bounds = array<i64: 1, 8, 128>}]} {
    %c0 = arith.constant 0 : index
    %c0_0 = arith.constant 0 : index
    %c0_1 = arith.constant 0 : index
    %0 = vector.load %arg1[%c0, %c0_0, %c0_1] : memref<1x8x48xbf16, #tpu.memory_space<vmem>>, vector<1x8x48xbf16>
    %1 = vector.shape_cast %0 : vector<1x8x48xbf16> to vector<8x48xbf16>
    %c0_2 = arith.constant 0 : index
    %c0_3 = arith.constant 0 : index
    %2 = vector.load %arg2[%c0_2, %c0_3] : memref<48x1024xbf16, #tpu.memory_space<vmem>>, vector<48x1024xbf16>
    %cst = arith.constant dense<0.000000e+00> : vector<8x1024xf32>
    %3 = tpu.matmul %1, %2, %cst {dimension_numbers = #tpu.dot_dimension_numbers<[1], [0], [0], [1], [0, 0, 1, 1], [], []>} : vector<8x48xbf16>, vector<48x1024xbf16>, vector<8x1024xf32> -> vector<8x1024xf32>
    %c0_4 = arith.constant 0 : index
    %c0_5 = arith.constant 0 : index
    %4 = vector.load %arg3[%c0_4, %c0_5] : memref<1x1024xf32, #tpu.memory_space<vmem>>, vector<1x1024xf32>
    %5 = vector.broadcast %4 : vector<1x1024xf32> to vector<8x1024xf32>
    %6 = arith.addf %3, %5 : vector<8x1024xf32>
    %cst_6 = arith.constant 0.000000e+00 : f32
    %7 = vector.broadcast %cst_6 : f32 to vector<8x1024xf32>
    %8 = arith.maximumf %6, %7 : vector<8x1024xf32>
    %9 = vector.extract_strided_slice %8 {offsets = [0, 0], sizes = [8, 512], strides = [1, 1]} : vector<8x1024xf32> to vector<8x512xf32>
    %10 = vector.extract_strided_slice %8 {offsets = [0, 512], sizes = [8, 512], strides = [1, 1]} : vector<8x1024xf32> to vector<8x512xf32>
    %11 = arith.maximumf %9, %10 : vector<8x512xf32>
    %12 = tpu.iota {dimensions = array<i32: 0>} : vector<8x1xi32>
    %c4_i32 = arith.constant 4 : i32
    %13 = vector.broadcast %c4_i32 : i32 to vector<8x1xi32>
    %14 = arith.cmpi slt, %12, %13 : vector<8x1xi32>
    %cst_7 = arith.constant 0.000000e+00 : f32
    %15 = vector.shape_cast %14 : vector<8x1xi1> to vector<8x1xi1>
    %16 = vector.broadcast %15 : vector<8x1xi1> to vector<8x512xi1>
    %17 = vector.broadcast %cst_7 : f32 to vector<8x512xf32>
    %18 = arith.select %16, %11, %17 : vector<8x512xi1>, vector<8x512xf32>
    %cst_8 = arith.constant 0.000000e+00 : f32
    %19 = vector.broadcast %cst_8 : f32 to vector<1x512xf32>
    %c0_9 = arith.constant 0 : index
    %c0_10 = arith.constant 0 : index
    %20 = vector.load %arg7[%c0_9, %c0_10] : memref<10x512xf32, #tpu.memory_space<vmem>>, vector<1x512xf32>
    tpu.vector_store %arg7[%c0_9, %c0_10], %19 {strides = array<i32>} : memref<10x512xf32, #tpu.memory_space<vmem>>, vector<1x512xf32>,
    %cst_11 = arith.constant 0.000000e+00 : f32
    %21 = vector.broadcast %cst_11 : f32 to vector<1x512xf32>
    %c9 = arith.constant 9 : index
    %c0_12 = arith.constant 0 : index
    %22 = vector.load %arg7[%c9, %c0_12] : memref<10x512xf32, #tpu.memory_space<vmem>>, vector<1x512xf32>
    tpu.vector_store %arg7[%c9, %c0_12], %21 {strides = array<i32>} : memref<10x512xf32, #tpu.memory_space<vmem>>, vector<1x512xf32>,
    %c1 = arith.constant 1 : index
    %c0_13 = arith.constant 0 : index
    %23 = vector.load %arg7[%c1, %c0_13] : memref<10x512xf32, #tpu.memory_space<vmem>>, vector<8x512xf32>
    tpu.vector_store %arg7[%c1, %c0_13], %18 {strides = array<i32>} : memref<10x512xf32, #tpu.memory_space<vmem>>, vector<8x512xf32>,
    %cst_14 = arith.constant 0.000000e+00 : f32
    %24 = vector.broadcast %cst_14 : f32 to vector<8x256xf32>
    %c0_15 = arith.constant 0 : index
    %c0_16 = arith.constant 0 : index
    %25 = vector.load %arg7[%c0_15, %c0_16] : memref<10x512xf32, #tpu.memory_space<vmem>>, vector<8x512xf32>
    %26 = arith.truncf %25 : vector<8x512xf32> to vector<8x512xbf16>
    %c0_17 = arith.constant 0 : index
    %c0_18 = arith.constant 0 : index
    %c0_19 = arith.constant 0 : index
    %27 = vector.load %arg4[%c0_17, %c0_18, %c0_19] : memref<3x512x256xbf16, #tpu.memory_space<vmem>>, vector<1x512x256xbf16>
    %28 = vector.shape_cast %27 : vector<1x512x256xbf16> to vector<512x256xbf16>
    %cst_20 = arith.constant dense<0.000000e+00> : vector<8x256xf32>
    %29 = tpu.matmul %26, %28, %cst_20 {dimension_numbers = #tpu.dot_dimension_numbers<[1], [0], [0], [1], [0, 0, 1, 1], [], []>} : vector<8x512xbf16>, vector<512x256xbf16>, vector<8x256xf32> -> vector<8x256xf32>
    %30 = arith.addf %24, %29 : vector<8x256xf32>
    %c1_21 = arith.constant 1 : index
    %c0_22 = arith.constant 0 : index
    %31 = vector.load %arg7[%c1_21, %c0_22] : memref<10x512xf32, #tpu.memory_space<vmem>>, vector<8x512xf32>
    %32 = arith.truncf %31 : vector<8x512xf32> to vector<8x512xbf16>
    %c1_23 = arith.constant 1 : index
    %c0_24 = arith.constant 0 : index
    %c0_25 = arith.constant 0 : index
    %33 = vector.load %arg4[%c1_23, %c0_24, %c0_25] : memref<3x512x256xbf16, #tpu.memory_space<vmem>>, vector<1x512x256xbf16>
    %34 = vector.shape_cast %33 : vector<1x512x256xbf16> to vector<512x256xbf16>
    %cst_26 = arith.constant dense<0.000000e+00> : vector<8x256xf32>
    %35 = tpu.matmul %32, %34, %cst_26 {dimension_numbers = #tpu.dot_dimension_numbers<[1], [0], [0], [1], [0, 0, 1, 1], [], []>} : vector<8x512xbf16>, vector<512x256xbf16>, vector<8x256xf32> -> vector<8x256xf32>
    %36 = arith.addf %30, %35 : vector<8x256xf32>
    %c2 = arith.constant 2 : index
    %c0_27 = arith.constant 0 : index
    %37 = vector.load %arg7[%c2, %c0_27] : memref<10x512xf32, #tpu.memory_space<vmem>>, vector<8x512xf32>
    %38 = arith.truncf %37 : vector<8x512xf32> to vector<8x512xbf16>
    %c2_28 = arith.constant 2 : index
    %c0_29 = arith.constant 0 : index
    %c0_30 = arith.constant 0 : index
    %39 = vector.load %arg4[%c2_28, %c0_29, %c0_30] : memref<3x512x256xbf16, #tpu.memory_space<vmem>>, vector<1x512x256xbf16>
    %40 = vector.shape_cast %39 : vector<1x512x256xbf16> to vector<512x256xbf16>
    %cst_31 = arith.constant dense<0.000000e+00> : vector<8x256xf32>
    %41 = tpu.matmul %38, %40, %cst_31 {dimension_numbers = #tpu.dot_dimension_numbers<[1], [0], [0], [1], [0, 0, 1, 1], [], []>} : vector<8x512xbf16>, vector<512x256xbf16>, vector<8x256xf32> -> vector<8x256xf32>
    %42 = arith.addf %36, %41 : vector<8x256xf32>
    %c0_32 = arith.constant 0 : index
    %c0_33 = arith.constant 0 : index
    %43 = vector.load %arg5[%c0_32, %c0_33] : memref<1x256xf32, #tpu.memory_space<vmem>>, vector<1x256xf32>
    %44 = vector.broadcast %43 : vector<1x256xf32> to vector<8x256xf32>
    %45 = arith.addf %42, %44 : vector<8x256xf32>
    %cst_34 = arith.constant 0.000000e+00 : f32
    %46 = vector.broadcast %cst_34 : f32 to vector<8x256xf32>
    %47 = arith.maximumf %45, %46 : vector<8x256xf32>
    %48 = vector.extract_strided_slice %47 {offsets = [0, 0], sizes = [8, 128], strides = [1, 1]} : vector<8x256xf32> to vector<8x128xf32>
    %49 = vector.extract_strided_slice %47 {offsets = [0, 128], sizes = [8, 128], strides = [1, 1]} : vector<8x256xf32> to vector<8x128xf32>
    %50 = arith.maximumf %48, %49 : vector<8x128xf32>
    %51 = arith.truncf %50 : vector<8x128xf32> to vector<8x128xbf16>
    %c0_35 = arith.constant 0 : index
    %c0_36 = arith.constant 0 : index
    %c0_37 = arith.constant 0 : index
    %52 = vector.load %arg6[%c0_35, %c0_36, %c0_37] : memref<1x8x128xbf16, #tpu.memory_space<vmem>>, vector<1x8x128xbf16>
    %53 = vector.shape_cast %52 : vector<1x8x128xbf16> to vector<8x128xbf16>
    %54 = vector.shape_cast %51 : vector<8x128xbf16> to vector<1x8x128xbf16>
    tpu.vector_store %arg6[%c0_35, %c0_36, %c0_37], %54 {strides = array<i32>} : memref<1x8x128xbf16, #tpu.memory_space<vmem>>, vector<1x8x128xbf16>,
    return
  }
  func.func @transform_0(%arg0: i32) -> (i32, i32, i32) {
    %c0_i32 = arith.constant 0 : i32
    %c0_i32_0 = arith.constant 0 : i32
    %c0_i32_1 = arith.constant 0 : i32
    return %arg0, %c0_i32, %c0_i32_0 : i32, i32, i32
  }
  func.func @transform_1(%arg0: i32) -> (i32, i32) {
    %c0_i32 = arith.constant 0 : i32
    %c0_i32_0 = arith.constant 0 : i32
    %c0_i32_1 = arith.constant 0 : i32
    return %c0_i32, %c0_i32_0 : i32, i32
  }
  func.func @transform_2(%arg0: i32) -> (i32, i32) {
    %c0_i32 = arith.constant 0 : i32
    %c0_i32_0 = arith.constant 0 : i32
    %c0_i32_1 = arith.constant 0 : i32
    return %c0_i32, %c0_i32_0 : i32, i32
  }
  func.func @transform_3(%arg0: i32) -> (i32, i32, i32) {
    %c0_i32 = arith.constant 0 : i32
    %c0_i32_0 = arith.constant 0 : i32
    %c0_i32_1 = arith.constant 0 : i32
    %c0_i32_2 = arith.constant 0 : i32
    return %c0_i32, %c0_i32_0, %c0_i32_1 : i32, i32, i32
  }
  func.func @transform_4(%arg0: i32) -> (i32, i32) {
    %c0_i32 = arith.constant 0 : i32
    %c0_i32_0 = arith.constant 0 : i32
    %c0_i32_1 = arith.constant 0 : i32
    return %c0_i32, %c0_i32_0 : i32, i32
  }
  func.func @transform_5(%arg0: i32) -> (i32, i32, i32) {
    %c0_i32 = arith.constant 0 : i32
    %c0_i32_0 = arith.constant 0 : i32
    %c0_i32_1 = arith.constant 0 : i32
    return %arg0, %c0_i32, %c0_i32_0 : i32, i32, i32
  }
}

module attributes {stable_mosaic.version = 11 : i64} {
  func.func @mlp_head_kernel(%arg0: i32, %arg1: i32, %arg2: memref<8x1024xbf16, #tpu.memory_space<vmem>>, %arg3: memref<1024x128xbf16, #tpu.memory_space<vmem>>, %arg4: memref<1x128xf32, #tpu.memory_space<vmem>>, %arg5: memref<1x128xf32, #tpu.memory_space<vmem>>, %arg6: memref<1x1xf32, #tpu.memory_space<vmem>>, %arg7: memref<8x1xf32, #tpu.memory_space<vmem>>, %arg8: memref<8x128xf32, #tpu.memory_space<vmem>>) attributes {dimension_semantics = [#tpu.dimension_semantics<parallel>, #tpu.dimension_semantics<arbitrary>], iteration_bounds = array<i64: 1, 1>, scalar_prefetch = 0 : i64, scratch_operands = 1 : i64, tpu.core_type = #tpu.core_type<tc>, window_params = [{transform_indices = @transform_0, window_bounds = array<i64: 8, 1024>}, {transform_indices = @transform_1, window_bounds = array<i64: 1024, 128>}, {pipeline_mode = #tpu.pipeline_mode<synchronous>, transform_indices = @transform_2, window_bounds = array<i64: 1, 128>}, {pipeline_mode = #tpu.pipeline_mode<synchronous>, transform_indices = @transform_3, window_bounds = array<i64: 1, 128>}, {pipeline_mode = #tpu.pipeline_mode<synchronous>, transform_indices = @transform_4, window_bounds = array<i64: 1, 1>}, {transform_indices = @transform_5, window_bounds = array<i64: 8, 1>}]} {
    %c0_i32 = arith.constant 0 : i32
    %0 = arith.cmpi eq, %arg1, %c0_i32 : i32
    %1 = arith.extui %0 : i1 to i32
    %c0_i32_0 = arith.constant 0 : i32
    %2 = arith.cmpi ne, %1, %c0_i32_0 : i32
    scf.if %2 {
      %cst_10 = arith.constant 0.000000e+00 : f32
      %12 = vector.broadcast %cst_10 : f32 to vector<8x128xf32>
      %c0_11 = arith.constant 0 : index
      %c0_12 = arith.constant 0 : index
      %13 = vector.load %arg8[%c0_11, %c0_12] : memref<8x128xf32, #tpu.memory_space<vmem>>, vector<8x128xf32>
      tpu.vector_store %arg8[%c0_11, %c0_12], %12 {strides = array<i32>} : memref<8x128xf32, #tpu.memory_space<vmem>>, vector<8x128xf32>,
    } else {
    }
    %c0 = arith.constant 0 : index
    %c0_1 = arith.constant 0 : index
    %3 = vector.load %arg8[%c0, %c0_1] : memref<8x128xf32, #tpu.memory_space<vmem>>, vector<8x128xf32>
    %c0_2 = arith.constant 0 : index
    %c0_3 = arith.constant 0 : index
    %4 = vector.load %arg2[%c0_2, %c0_3] : memref<8x1024xbf16, #tpu.memory_space<vmem>>, vector<8x1024xbf16>
    %c0_4 = arith.constant 0 : index
    %c0_5 = arith.constant 0 : index
    %5 = vector.load %arg3[%c0_4, %c0_5] : memref<1024x128xbf16, #tpu.memory_space<vmem>>, vector<1024x128xbf16>
    %cst = arith.constant dense<0.000000e+00> : vector<8x128xf32>
    %6 = tpu.matmul %4, %5, %cst {dimension_numbers = #tpu.dot_dimension_numbers<[1], [0], [0], [1], [0, 0, 1, 1], [], []>} : vector<8x1024xbf16>, vector<1024x128xbf16>, vector<8x128xf32> -> vector<8x128xf32>
    %7 = arith.addf %3, %6 : vector<8x128xf32>
    %c0_6 = arith.constant 0 : index
    %c0_7 = arith.constant 0 : index
    %8 = vector.load %arg8[%c0_6, %c0_7] : memref<8x128xf32, #tpu.memory_space<vmem>>, vector<8x128xf32>
    tpu.vector_store %arg8[%c0_6, %c0_7], %7 {strides = array<i32>} : memref<8x128xf32, #tpu.memory_space<vmem>>, vector<8x128xf32>,
    %c0_i32_8 = arith.constant 0 : i32
    %9 = arith.cmpi eq, %arg1, %c0_i32_8 : i32
    %10 = arith.extui %9 : i1 to i32
    %c0_i32_9 = arith.constant 0 : i32
    %11 = arith.cmpi ne, %10, %c0_i32_9 : i32
    scf.if %11 {
      %c0_10 = arith.constant 0 : index
      %c0_11 = arith.constant 0 : index
      %12 = vector.load %arg8[%c0_10, %c0_11] : memref<8x128xf32, #tpu.memory_space<vmem>>, vector<8x128xf32>
      %c0_12 = arith.constant 0 : index
      %c0_13 = arith.constant 0 : index
      %13 = vector.load %arg4[%c0_12, %c0_13] : memref<1x128xf32, #tpu.memory_space<vmem>>, vector<1x128xf32>
      %14 = vector.broadcast %13 : vector<1x128xf32> to vector<8x128xf32>
      %15 = arith.addf %12, %14 : vector<8x128xf32>
      %cst_14 = arith.constant 0.000000e+00 : f32
      %16 = vector.broadcast %cst_14 : f32 to vector<8x128xf32>
      %17 = arith.maximumf %15, %16 : vector<8x128xf32>
      %c0_15 = arith.constant 0 : index
      %c0_16 = arith.constant 0 : index
      %18 = vector.load %arg5[%c0_15, %c0_16] : memref<1x128xf32, #tpu.memory_space<vmem>>, vector<1x128xf32>
      %19 = vector.broadcast %18 : vector<1x128xf32> to vector<8x128xf32>
      %20 = arith.mulf %17, %19 : vector<8x128xf32>
      %cst_17 = arith.constant dense<0.000000e+00> : vector<8xf32>
      %21 = vector.multi_reduction <add>, %20, %cst_17 [1] : vector<8x128xf32> to vector<8xf32>
      %22 = vector.shape_cast %21 : vector<8xf32> to vector<8x1xf32>
      %c0_18 = arith.constant 0 : index
      %c0_19 = arith.constant 0 : index
      %23 = vector.load %arg6[%c0_18, %c0_19] : memref<1x1xf32, #tpu.memory_space<vmem>>, vector<1x1xf32>
      %24 = vector.broadcast %23 : vector<1x1xf32> to vector<8x1xf32>
      %25 = arith.addf %22, %24 : vector<8x1xf32>
      %26 = arith.negf %25 : vector<8x1xf32>
      %27 = math.exp %26 : vector<8x1xf32>
      %cst_20 = arith.constant 1.000000e+00 : f32
      %28 = vector.broadcast %cst_20 : f32 to vector<8x1xf32>
      %29 = arith.addf %28, %27 : vector<8x1xf32>
      %30 = arith.divf %28, %29 : vector<8x1xf32>
      %c0_21 = arith.constant 0 : index
      %c0_22 = arith.constant 0 : index
      %31 = vector.load %arg7[%c0_21, %c0_22] : memref<8x1xf32, #tpu.memory_space<vmem>>, vector<8x1xf32>
      tpu.vector_store %arg7[%c0_21, %c0_22], %30 {strides = array<i32>} : memref<8x1xf32, #tpu.memory_space<vmem>>, vector<8x1xf32>,
    } else {
    }
    return
  }
  func.func @transform_0(%arg0: i32, %arg1: i32) -> (i32, i32) {
    %c0_i32 = arith.constant 0 : i32
    return %arg0, %arg1 : i32, i32
  }
  func.func @transform_1(%arg0: i32, %arg1: i32) -> (i32, i32) {
    %c0_i32 = arith.constant 0 : i32
    %c0_i32_0 = arith.constant 0 : i32
    return %arg1, %c0_i32 : i32, i32
  }
  func.func @transform_2(%arg0: i32, %arg1: i32) -> (i32, i32) {
    %c0_i32 = arith.constant 0 : i32
    %c0_i32_0 = arith.constant 0 : i32
    %c0_i32_1 = arith.constant 0 : i32
    return %c0_i32, %c0_i32_0 : i32, i32
  }
  func.func @transform_3(%arg0: i32, %arg1: i32) -> (i32, i32) {
    %c0_i32 = arith.constant 0 : i32
    %c0_i32_0 = arith.constant 0 : i32
    %c0_i32_1 = arith.constant 0 : i32
    return %c0_i32, %c0_i32_0 : i32, i32
  }
  func.func @transform_4(%arg0: i32, %arg1: i32) -> (i32, i32) {
    %c0_i32 = arith.constant 0 : i32
    %c0_i32_0 = arith.constant 0 : i32
    %c0_i32_1 = arith.constant 0 : i32
    return %c0_i32, %c0_i32_0 : i32, i32
  }
  func.func @transform_5(%arg0: i32, %arg1: i32) -> (i32, i32) {
    %c0_i32 = arith.constant 0 : i32
    %c0_i32_0 = arith.constant 0 : i32
    return %arg0, %c0_i32 : i32, i32
  }
}

</mosaic_0001>

<llo_original>
// kernel: promoter_cnn_forward.3
$region0: #{promoter_cnn_forward.3}
  #allocation0 [shape = 'u32[]', space=smem, size = 0x4, offset = 0x4, fixed_abs, tag = 'smem constant byte address 0x4 - core index']
  #allocation1 [shape = 'u32[144,128]{1,0:T(1,128)}', space=vmem, size = 0x12000, scoped, tag = 'internal scratch']
  #allocation2 [shape = 'f32[8,128]{1,0:T(8,128)}', space=vmem, size = 0x1000, scoped, tag = 'scratch operand']
  #allocation3 [shape = 'f32[1,1]{1,0:T(1,128)S(1)}', space=vmem, size = 0x200, scoped, tag = 'scoped memory for promoter_cnn_forward.3']
  %s0 = inlined_call_operand.vmem [shape: bf16[8,1024], index: 0, kind: input, shape index: {}]
  %s1 = inlined_call_operand.vmem [shape: bf16[1024,128], index: 1, kind: input, shape index: {}]
  %s2 = inlined_call_operand.vmem [shape: f32[1,128], index: 2, kind: input, shape index: {}]
  %s3 = inlined_call_operand.vmem [shape: f32[1,128], index: 3, kind: input, shape index: {}]
  %s4 = inlined_call_operand.<no memory space> [shape: f32[1,1], index: 4, kind: input, shape index: {}]
  %s5 = inlined_call_operand.vmem [shape: f32[8,1], index: 5, kind: output, shape index: {}]
  %s6 = sld [smem:[#allocation0]]
  $region38: #{promoter_cnn_forward.3} parent=0
    _
  %s8 = ssub.s32 1, %s6
  %s9 = scalar_select 0, %s8, %s6
  %v10 = vstv %s4
  %11 = vst [vmem:[#allocation3] sm:$0x1] %v10
  // Predicated region
  $region2: #{promoter_cnn_forward.3} parent=0 // pred_check
    _
  $region3: #{promoter_cnn_forward.3} parent=0 // pred_check_branch
    %13 = sbr.rel (0) target = $region5
  $region4: #{promoter_cnn_forward.3} parent=0 // pred_region
    _
  $region5: #{promoter_cnn_forward.3} parent=0 // pred_fallthru
    _
  // Predicated region
  $region6: #{promoter_cnn_forward.3} parent=0 // pred_check
    _
  $region7: #{promoter_cnn_forward.3} parent=0 // pred_check_branch
    %15 = sbr.rel (0) target = $region9
  $region8: #{promoter_cnn_forward.3} parent=0 // pred_region
    _
  $region9: #{promoter_cnn_forward.3} parent=0 // pred_fallthru
    _
  // Predicated region
  $region10: #{promoter_cnn_forward.3} parent=0 // pred_check
    _
  $region11: #{promoter_cnn_forward.3} parent=0 // pred_check_branch
    %17 = sbr.rel (0) target = $region13
  $region12: #{promoter_cnn_forward.3} parent=0 // pred_region
    _
  $region13: #{promoter_cnn_forward.3} parent=0 // pred_fallthru
    _
  // Predicated region
  $region14: #{promoter_cnn_forward.3} parent=0 // pred_check
    _
  $region15: #{promoter_cnn_forward.3} parent=0 // pred_check_branch
    %19 = sbr.rel (0) target = $region17
  $region16: #{promoter_cnn_forward.3} parent=0 // pred_region
    _
  $region17: #{promoter_cnn_forward.3} parent=0 // pred_fallthru
    _
  // Predicated region
  $region18: #{promoter_cnn_forward.3} parent=0 // pred_check
    _
  $region19: #{promoter_cnn_forward.3} parent=0 // pred_check_branch
    %21 = sbr.rel (0) target = $region21
  $region20: #{promoter_cnn_forward.3} parent=0 // pred_region
    _
  $region21: #{promoter_cnn_forward.3} parent=0 // pred_fallthru
    _
  %p23 = scmp.eq.s32.totalorder 0, 0
  // Predicated region
  $region22: #{promoter_cnn_forward.3} parent=0 // pred_check
    %p24 = pneg %p23
  $region23: #{promoter_cnn_forward.3} parent=0 // pred_check_branch
    %26 = sbr.rel (%p24) target = $region25
  $region24: #{promoter_cnn_forward.3} parent=0 // pred_region
    %27 = vst [vmem:[#allocation2] sm:$0xff] 0.0
  $region25: #{promoter_cnn_forward.3} parent=0 // pred_fallthru
    _
  %v28 = vld [vmem:[#allocation2] sm:$0xff]
  %v29 = vld [vmem:[%s0] sm:$0xff]
  %v30 = vld [vmem:[%s0 + $0x8] sm:$0xff]
  %v31 = vld [vmem:[%s0 + $0x10] sm:$0xff]
  %v32 = vld [vmem:[%s0 + $0x18] sm:$0xff]
  %v33 = vld [vmem:[%s1] sm:$0xf]
  %v34 = vld [vmem:[%s1 + $0x4] sm:$0xf]
  %v35 = vld [vmem:[%s1 + $0x8] sm:$0xf]
  %v36 = vld [vmem:[%s1 + $0xc] sm:$0xf]
  %v37 = vld [vmem:[%s1 + $0x10] sm:$0xf]
  %v38 = vld [vmem:[%s1 + $0x14] sm:$0xf]
  %v39 = vld [vmem:[%s1 + $0x18] sm:$0xf]
  %v40 = vld [vmem:[%s1 + $0x1c] sm:$0xf]
  %v41 = vld [vmem:[%s1 + $0x20] sm:$0xf]
  %v42 = vld [vmem:[%s1 + $0x24] sm:$0xf]
  %v43 = vld [vmem:[%s1 + $0x28] sm:$0xf]
  %v44 = vld [vmem:[%s1 + $0x2c] sm:$0xf]
  %v45 = vld [vmem:[%s1 + $0x30] sm:$0xf]
  %v46 = vld [vmem:[%s1 + $0x34] sm:$0xf]
  %v47 = vld [vmem:[%s1 + $0x38] sm:$0xf]
  %v48 = vld [vmem:[%s1 + $0x3c] sm:$0xf]
  %v49 = vld [vmem:[%s1 + $0x40] sm:$0xf]
  %v50 = vld [vmem:[%s1 + $0x44] sm:$0xf]
  %v51 = vld [vmem:[%s1 + $0x48] sm:$0xf]
  %v52 = vld [vmem:[%s1 + $0x4c] sm:$0xf]
  %v53 = vld [vmem:[%s1 + $0x50] sm:$0xf]
  %v54 = vld [vmem:[%s1 + $0x54] sm:$0xf]
  %v55 = vld [vmem:[%s1 + $0x58] sm:$0xf]
  %v56 = vld [vmem:[%s1 + $0x5c] sm:$0xf]
  %v57 = vld [vmem:[%s1 + $0x60] sm:$0xf]
  %v58 = vld [vmem:[%s1 + $0x64] sm:$0xf]
  %v59 = vld [vmem:[%s1 + $0x68] sm:$0xf]
  %v60 = vld [vmem:[%s1 + $0x6c] sm:$0xf]
  %v61 = vld [vmem:[%s1 + $0x70] sm:$0xf]
  %v62 = vld [vmem:[%s1 + $0x74] sm:$0xf]
  %v63 = vld [vmem:[%s1 + $0x78] sm:$0xf]
  %v64 = vld [vmem:[%s1 + $0x7c] sm:$0xf]
  %v65 = vld [vmem:[%s1 + $0x80] sm:$0xf]
  %v66 = vld [vmem:[%s1 + $0x84] sm:$0xf]
  %v67 = vld [vmem:[%s1 + $0x88] sm:$0xf]
  %v68 = vld [vmem:[%s1 + $0x8c] sm:$0xf]
  %v69 = vld [vmem:[%s1 + $0x90] sm:$0xf]
  %v70 = vld [vmem:[%s1 + $0x94] sm:$0xf]
  %v71 = vld [vmem:[%s1 + $0x98] sm:$0xf]
  %v72 = vld [vmem:[%s1 + $0x9c] sm:$0xf]
  %v73 = vld [vmem:[%s1 + $0xa0] sm:$0xf]
  %v74 = vld [vmem:[%s1 + $0xa4] sm:$0xf]
  %v75 = vld [vmem:[%s1 + $0xa8] sm:$0xf]
  %v76 = vld [vmem:[%s1 + $0xac] sm:$0xf]
  %v77 = vld [vmem:[%s1 + $0xb0] sm:$0xf]
  %v78 = vld [vmem:[%s1 + $0xb4] sm:$0xf]
  %v79 = vld [vmem:[%s1 + $0xb8] sm:$0xf]
  %v80 = vld [vmem:[%s1 + $0xbc] sm:$0xf]
  %v81 = vld [vmem:[%s1 + $0xc0] sm:$0xf]
  %v82 = vld [vmem:[%s1 + $0xc4] sm:$0xf]
  %v83 = vld [vmem:[%s1 + $0xc8] sm:$0xf]
  %v84 = vld [vmem:[%s1 + $0xcc] sm:$0xf]
  %v85 = vld [vmem:[%s1 + $0xd0] sm:$0xf]
  %v86 = vld [vmem:[%s1 + $0xd4] sm:$0xf]
  %v87 = vld [vmem:[%s1 + $0xd8] sm:$0xf]
  %v88 = vld [vmem:[%s1 + $0xdc] sm:$0xf]
  %v89 = vld [vmem:[%s1 + $0xe0] sm:$0xf]
  %v90 = vld [vmem:[%s1 + $0xe4] sm:$0xf]
  %v91 = vld [vmem:[%s1 + $0xe8] sm:$0xf]
  %v92 = vld [vmem:[%s1 + $0xec] sm:$0xf]
  %v93 = vld [vmem:[%s1 + $0xf0] sm:$0xf]
  %v94 = vld [vmem:[%s1 + $0xf4] sm:$0xf]
  %v95 = vld [vmem:[%s1 + $0xf8] sm:$0xf]
  %v96 = vld [vmem:[%s1 + $0xfc] sm:$0xf]
  %v97 = vld [vmem:[%s1 + $0x100] sm:$0xf]
  %v98 = vld [vmem:[%s1 + $0x104] sm:$0xf]
  %v99 = vld [vmem:[%s1 + $0x108] sm:$0xf]
  %v100 = vld [vmem:[%s1 + $0x10c] sm:$0xf]
  %v101 = vld [vmem:[%s1 + $0x110] sm:$0xf]
  %v102 = vld [vmem:[%s1 + $0x114] sm:$0xf]
  %v103 = vld [vmem:[%s1 + $0x118] sm:$0xf]
  %v104 = vld [vmem:[%s1 + $0x11c] sm:$0xf]
  %v105 = vld [vmem:[%s1 + $0x120] sm:$0xf]
  %v106 = vld [vmem:[%s1 + $0x124] sm:$0xf]
  %v107 = vld [vmem:[%s1 + $0x128] sm:$0xf]
  %v108 = vld [vmem:[%s1 + $0x12c] sm:$0xf]
  %v109 = vld [vmem:[%s1 + $0x130] sm:$0xf]
  %v110 = vld [vmem:[%s1 + $0x134] sm:$0xf]
  %v111 = vld [vmem:[%s1 + $0x138] sm:$0xf]
  %v112 = vld [vmem:[%s1 + $0x13c] sm:$0xf]
  %v113 = vld [vmem:[%s1 + $0x140] sm:$0xf]
  %v114 = vld [vmem:[%s1 + $0x144] sm:$0xf]
  %v115 = vld [vmem:[%s1 + $0x148] sm:$0xf]
  %v116 = vld [vmem:[%s1 + $0x14c] sm:$0xf]
  %v117 = vld [vmem:[%s1 + $0x150] sm:$0xf]
  %v118 = vld [vmem:[%s1 + $0x154] sm:$0xf]
  %v119 = vld [vmem:[%s1 + $0x158] sm:$0xf]
  %v120 = vld [vmem:[%s1 + $0x15c] sm:$0xf]
  %v121 = vld [vmem:[%s1 + $0x160] sm:$0xf]
  %v122 = vld [vmem:[%s1 + $0x164] sm:$0xf]
  %v123 = vld [vmem:[%s1 + $0x168] sm:$0xf]
  %v124 = vld [vmem:[%s1 + $0x16c] sm:$0xf]
  %v125 = vld [vmem:[%s1 + $0x170] sm:$0xf]
  %v126 = vld [vmem:[%s1 + $0x174] sm:$0xf]
  %v127 = vld [vmem:[%s1 + $0x178] sm:$0xf]
  %v128 = vld [vmem:[%s1 + $0x17c] sm:$0xf]
  %v129 = vld [vmem:[%s1 + $0x180] sm:$0xf]
  %v130 = vld [vmem:[%s1 + $0x184] sm:$0xf]
  %v131 = vld [vmem:[%s1 + $0x188] sm:$0xf]
  %v132 = vld [vmem:[%s1 + $0x18c] sm:$0xf]
  %v133 = vld [vmem:[%s1 + $0x190] sm:$0xf]
  %v134 = vld [vmem:[%s1 + $0x194] sm:$0xf]
  %v135 = vld [vmem:[%s1 + $0x198] sm:$0xf]
  %v136 = vld [vmem:[%s1 + $0x19c] sm:$0xf]
  %v137 = vld [vmem:[%s1 + $0x1a0] sm:$0xf]
  %v138 = vld [vmem:[%s1 + $0x1a4] sm:$0xf]
  %v139 = vld [vmem:[%s1 + $0x1a8] sm:$0xf]
  %v140 = vld [vmem:[%s1 + $0x1ac] sm:$0xf]
  %v141 = vld [vmem:[%s1 + $0x1b0] sm:$0xf]
  %v142 = vld [vmem:[%s1 + $0x1b4] sm:$0xf]
  %v143 = vld [vmem:[%s1 + $0x1b8] sm:$0xf]
  %v144 = vld [vmem:[%s1 + $0x1bc] sm:$0xf]
  %v145 = vld [vmem:[%s1 + $0x1c0] sm:$0xf]
  %v146 = vld [vmem:[%s1 + $0x1c4] sm:$0xf]
  %v147 = vld [vmem:[%s1 + $0x1c8] sm:$0xf]
  %v148 = vld [vmem:[%s1 + $0x1cc] sm:$0xf]
  %v149 = vld [vmem:[%s1 + $0x1d0] sm:$0xf]
  %v150 = vld [vmem:[%s1 + $0x1d4] sm:$0xf]
  %v151 = vld [vmem:[%s1 + $0x1d8] sm:$0xf]
  %v152 = vld [vmem:[%s1 + $0x1dc] sm:$0xf]
  %v153 = vld [vmem:[%s1 + $0x1e0] sm:$0xf]
  %v154 = vld [vmem:[%s1 + $0x1e4] sm:$0xf]
  %v155 = vld [vmem:[%s1 + $0x1e8] sm:$0xf]
  %v156 = vld [vmem:[%s1 + $0x1ec] sm:$0xf]
  %v157 = vld [vmem:[%s1 + $0x1f0] sm:$0xf]
  %v158 = vld [vmem:[%s1 + $0x1f4] sm:$0xf]
  %v159 = vld [vmem:[%s1 + $0x1f8] sm:$0xf]
  %v160 = vld [vmem:[%s1 + $0x1fc] sm:$0xf]
  %v165 = vunpack.c.l.b16 %v29
  %v166 = vunpack.c.h.b16 %v29
  %v167 = vunpack.c.l.b16 %v30
  %v168 = vunpack.c.h.b16 %v30
  %v169 = vunpack.c.l.b16 %v31
  %v170 = vunpack.c.h.b16 %v31
  %v171 = vunpack.c.l.b16 %v32
  %v172 = vunpack.c.h.b16 %v32
  %v173 = vpack.c.b16 %v165, %v165
  %v174 = vpack.c.b16 %v166, %v166
  %v175 = vpack.c.b16 %v167, %v167
  %v176 = vpack.c.b16 %v168, %v168
  %v177 = vpack.c.b16 %v169, %v169
  %v178 = vpack.c.b16 %v170, %v170
  %v179 = vpack.c.b16 %v171, %v171
  %v180 = vpack.c.b16 %v172, %v172
  %v317 = vunpack.c.l.b16 %v33
  %v318 = vunpack.c.l.b16 %v34
  %v319 = vunpack.c.l.b16 %v35
  %v320 = vunpack.c.l.b16 %v36
  %v321 = vunpack.c.l.b16 %v37
  %v322 = vunpack.c.l.b16 %v38
  %v323 = vunpack.c.l.b16 %v39
  %v324 = vunpack.c.l.b16 %v40
  %v325 = vunpack.c.l.b16 %v41
  %v326 = vunpack.c.l.b16 %v42
  %v327 = vunpack.c.l.b16 %v43
  %v328 = vunpack.c.l.b16 %v44
  %v329 = vunpack.c.l.b16 %v45
  %v330 = vunpack.c.l.b16 %v46
  %v331 = vunpack.c.l.b16 %v47
  %v332 = vunpack.c.l.b16 %v48
  %v333 = vunpack.c.l.b16 %v49
  %v334 = vunpack.c.l.b16 %v50
  %v335 = vunpack.c.l.b16 %v51
  %v336 = vunpack.c.l.b16 %v52
  %v337 = vunpack.c.l.b16 %v53
  %v338 = vunpack.c.l.b16 %v54
  %v339 = vunpack.c.l.b16 %v55
  %v340 = vunpack.c.l.b16 %v56
  %v341 = vunpack.c.l.b16 %v57
  %v342 = vunpack.c.l.b16 %v58
  %v343 = vunpack.c.l.b16 %v59
  %v344 = vunpack.c.l.b16 %v60
  %v345 = vunpack.c.l.b16 %v61
  %v346 = vunpack.c.l.b16 %v62
  %v347 = vunpack.c.l.b16 %v63
  %v348 = vunpack.c.l.b16 %v64
  %v349 = vunpack.c.l.b16 %v65
  %v350 = vunpack.c.l.b16 %v66
  %v351 = vunpack.c.l.b16 %v67
  %v352 = vunpack.c.l.b16 %v68
  %v353 = vunpack.c.l.b16 %v69
  %v354 = vunpack.c.l.b16 %v70
  %v355 = vunpack.c.l.b16 %v71
  %v356 = vunpack.c.l.b16 %v72
  %v357 = vunpack.c.l.b16 %v73
  %v358 = vunpack.c.l.b16 %v74
  %v359 = vunpack.c.l.b16 %v75
  %v360 = vunpack.c.l.b16 %v76
  %v361 = vunpack.c.l.b16 %v77
  %v362 = vunpack.c.l.b16 %v78
  %v363 = vunpack.c.l.b16 %v79
  %v364 = vunpack.c.l.b16 %v80
  %v365 = vunpack.c.l.b16 %v81
  %v366 = vunpack.c.l.b16 %v82
  %v367 = vunpack.c.l.b16 %v83
  %v368 = vunpack.c.l.b16 %v84
  %v369 = vunpack.c.l.b16 %v85
  %v370 = vunpack.c.l.b16 %v86
  %v371 = vunpack.c.l.b16 %v87
  %v372 = vunpack.c.l.b16 %v88
  %v373 = vunpack.c.l.b16 %v89
  %v374 = vunpack.c.l.b16 %v90
  %v375 = vunpack.c.l.b16 %v91
  %v376 = vunpack.c.l.b16 %v92
  %v377 = vunpack.c.l.b16 %v93
  %v378 = vunpack.c.l.b16 %v94
  %v379 = vunpack.c.l.b16 %v95
  %v380 = vunpack.c.l.b16 %v96
  %v381 = vunpack.c.l.b16 %v97
  %v382 = vunpack.c.l.b16 %v98
  %v383 = vunpack.c.l.b16 %v99
  %v384 = vunpack.c.l.b16 %v100
  %v385 = vunpack.c.l.b16 %v101
  %v386 = vunpack.c.l.b16 %v102
  %v387 = vunpack.c.l.b16 %v103
  %v388 = vunpack.c.l.b16 %v104
  %v389 = vunpack.c.l.b16 %v105
  %v390 = vunpack.c.l.b16 %v106
  %v391 = vunpack.c.l.b16 %v107
  %v392 = vunpack.c.l.b16 %v108
  %v393 = vunpack.c.l.b16 %v109
  %v394 = vunpack.c.l.b16 %v110
  %v395 = vunpack.c.l.b16 %v111
  %v396 = vunpack.c.l.b16 %v112
  %v397 = vunpack.c.l.b16 %v113
  %v398 = vunpack.c.l.b16 %v114
  %v399 = vunpack.c.l.b16 %v115
  %v400 = vunpack.c.l.b16 %v116
  %v401 = vunpack.c.l.b16 %v117
  %v402 = vunpack.c.l.b16 %v118
  %v403 = vunpack.c.l.b16 %v119
  %v404 = vunpack.c.l.b16 %v120
  %v405 = vunpack.c.l.b16 %v121
  %v406 = vunpack.c.l.b16 %v122
  %v407 = vunpack.c.l.b16 %v123
  %v408 = vunpack.c.l.b16 %v124
  %v409 = vunpack.c.l.b16 %v125
  %v410 = vunpack.c.l.b16 %v126
  %v411 = vunpack.c.l.b16 %v127
  %v412 = vunpack.c.l.b16 %v128
  %v413 = vunpack.c.l.b16 %v129
  %v414 = vunpack.c.l.b16 %v130
  %v415 = vunpack.c.l.b16 %v131
  %v416 = vunpack.c.l.b16 %v132
  %v417 = vunpack.c.l.b16 %v133
  %v418 = vunpack.c.l.b16 %v134
  %v419 = vunpack.c.l.b16 %v135
  %v420 = vunpack.c.l.b16 %v136
  %v421 = vunpack.c.l.b16 %v137
  %v422 = vunpack.c.l.b16 %v138
  %v423 = vunpack.c.l.b16 %v139
  %v424 = vunpack.c.l.b16 %v140
  %v425 = vunpack.c.l.b16 %v141
  %v426 = vunpack.c.l.b16 %v142
  %v427 = vunpack.c.l.b16 %v143
  %v428 = vunpack.c.l.b16 %v144
  %v429 = vunpack.c.l.b16 %v145
  %v430 = vunpack.c.l.b16 %v146
  %v431 = vunpack.c.l.b16 %v147
  %v432 = vunpack.c.l.b16 %v148
  %v433 = vunpack.c.l.b16 %v149
  %v434 = vunpack.c.l.b16 %v150
  %v435 = vunpack.c.l.b16 %v151
  %v436 = vunpack.c.l.b16 %v152
  %v437 = vunpack.c.l.b16 %v153
  %v438 = vunpack.c.l.b16 %v154
  %v439 = vunpack.c.l.b16 %v155
  %v440 = vunpack.c.l.b16 %v156
  %v441 = vunpack.c.l.b16 %v157
  %v442 = vunpack.c.l.b16 %v158
  %v443 = vunpack.c.l.b16 %v159
  %v444 = vunpack.c.l.b16 %v160
  %v445 = vpack.c.b16 %v318, %v317
  %v446 = vpack.c.b16 %v320, %v319
  %v447 = vpack.c.b16 %v322, %v321
  %v448 = vpack.c.b16 %v324, %v323
  %v449 = vpack.c.b16 %v326, %v325
  %v450 = vpack.c.b16 %v328, %v327
  %v451 = vpack.c.b16 %v330, %v329
  %v452 = vpack.c.b16 %v332, %v331
  %v453 = vpack.c.b16 %v334, %v333
  %v454 = vpack.c.b16 %v336, %v335
  %v455 = vpack.c.b16 %v338, %v337
  %v456 = vpack.c.b16 %v340, %v339
  %v457 = vpack.c.b16 %v342, %v341
  %v458 = vpack.c.b16 %v344, %v343
  %v459 = vpack.c.b16 %v346, %v345
  %v460 = vpack.c.b16 %v348, %v347
  %v461 = vpack.c.b16 %v350, %v349
  %v462 = vpack.c.b16 %v352, %v351
  %v463 = vpack.c.b16 %v354, %v353
  %v464 = vpack.c.b16 %v356, %v355
  %v465 = vpack.c.b16 %v358, %v357
  %v466 = vpack.c.b16 %v360, %v359
  %v467 = vpack.c.b16 %v362, %v361
  %v468 = vpack.c.b16 %v364, %v363
  %v469 = vpack.c.b16 %v366, %v365
  %v470 = vpack.c.b16 %v368, %v367
  %v471 = vpack.c.b16 %v370, %v369
  %v472 = vpack.c.b16 %v372, %v371
  %v473 = vpack.c.b16 %v374, %v373
  %v474 = vpack.c.b16 %v376, %v375
  %v475 = vpack.c.b16 %v378, %v377
  %v476 = vpack.c.b16 %v380, %v379
  %v477 = vpack.c.b16 %v382, %v381
  %v478 = vpack.c.b16 %v384, %v383
  %v479 = vpack.c.b16 %v386, %v385
  %v480 = vpack.c.b16 %v388, %v387
  %v481 = vpack.c.b16 %v390, %v389
  %v482 = vpack.c.b16 %v392, %v391
  %v483 = vpack.c.b16 %v394, %v393
  %v484 = vpack.c.b16 %v396, %v395
  %v485 = vpack.c.b16 %v398, %v397
  %v486 = vpack.c.b16 %v400, %v399
  %v487 = vpack.c.b16 %v402, %v401
  %v488 = vpack.c.b16 %v404, %v403
  %v489 = vpack.c.b16 %v406, %v405
  %v490 = vpack.c.b16 %v408, %v407
  %v491 = vpack.c.b16 %v410, %v409
  %v492 = vpack.c.b16 %v412, %v411
  %v493 = vpack.c.b16 %v414, %v413
  %v494 = vpack.c.b16 %v416, %v415
  %v495 = vpack.c.b16 %v418, %v417
  %v496 = vpack.c.b16 %v420, %v419
  %v497 = vpack.c.b16 %v422, %v421
  %v498 = vpack.c.b16 %v424, %v423
  %v499 = vpack.c.b16 %v426, %v425
  %v500 = vpack.c.b16 %v428, %v427
  %v501 = vpack.c.b16 %v430, %v429
  %v502 = vpack.c.b16 %v432, %v431
  %v503 = vpack.c.b16 %v434, %v433
  %v504 = vpack.c.b16 %v436, %v435
  %v505 = vpack.c.b16 %v438, %v437
  %v506 = vpack.c.b16 %v440, %v439
  %v507 = vpack.c.b16 %v442, %v441
  %v508 = vpack.c.b16 %v444, %v443
  %573 = vmatprep.subr.bf16.mxu0 0
  %574 = vmatpush1.bf16.msra.mxu0 %v445
  %575 = vmatprep.subr.bf16.mxu0 0
  %576 = vmatpush1.bf16.msra.mxu0 %v446
  %577 = vmatprep.subr.bf16.mxu0 0
  %578 = vmatpush1.bf16.msra.mxu0 %v447
  %579 = vmatprep.subr.bf16.mxu0 0
  %580 = vmatpush1.bf16.msra.mxu0 %v448
  %581 = vmatprep.subr.bf16.mxu0 0
  %582 = vmatpush1.bf16.msra.mxu0 %v449
  %583 = vmatprep.subr.bf16.mxu0 0
  %584 = vmatpush1.bf16.msra.mxu0 %v450
  %585 = vmatprep.subr.bf16.mxu0 0
  %586 = vmatpush1.bf16.msra.mxu0 %v451
  %587 = vmatprep.subr.bf16.mxu0 0
  %588 = vmatpush1.bf16.msra.mxu0 %v452
  %589 = vmatprep.subr.bf16.mxu0 0
  %590 = vmatpush1.bf16.msra.mxu0 %v453
  %591 = vmatprep.subr.bf16.mxu0 0
  %592 = vmatpush1.bf16.msra.mxu0 %v454
  %593 = vmatprep.subr.bf16.mxu0 0
  %594 = vmatpush1.bf16.msra.mxu0 %v455
  %595 = vmatprep.subr.bf16.mxu0 0
  %596 = vmatpush1.bf16.msra.mxu0 %v456
  %597 = vmatprep.subr.bf16.mxu0 0
  %598 = vmatpush1.bf16.msra.mxu0 %v457
  %599 = vmatprep.subr.bf16.mxu0 0
  %600 = vmatpush1.bf16.msra.mxu0 %v458
  %601 = vmatprep.subr.bf16.mxu0 0
  %602 = vmatpush1.bf16.msra.mxu0 %v459
  %603 = vmatprep.subr.bf16.mxu0 0
  %604 = vmatpush1.bf16.msra.mxu0 %v460
  %605 = vmatprep.mubr.bf16.mxu0 %v174
  %606 = vmatmul.mubr.bf16.gmra.mrb[0].mxu0 %v173
  %v607 = vpop.f32.mrb[0].mxu0
  %v608 = vadd.f32 0.0, %v607
  %v609 = vpop.f32.mrb[0].mxu0
  %v610 = vpop.f32.mrb[0].mxu0
  %v611 = vpop.f32.mrb[0].mxu0
  %612 = vdwg.mxu0
  %613 = vmatprep.subr.bf16.mxu0 0
  %614 = vmatpush1.bf16.msra.mxu0 %v461
  %615 = vmatprep.subr.bf16.mxu0 0
  %616 = vmatpush1.bf16.msra.mxu0 %v462
  %617 = vmatprep.subr.bf16.mxu0 0
  %618 = vmatpush1.bf16.msra.mxu0 %v463
  %619 = vmatprep.subr.bf16.mxu0 0
  %620 = vmatpush1.bf16.msra.mxu0 %v464
  %621 = vmatprep.subr.bf16.mxu0 0
  %622 = vmatpush1.bf16.msra.mxu0 %v465
  %623 = vmatprep.subr.bf16.mxu0 0
  %624 = vmatpush1.bf16.msra.mxu0 %v466
  %625 = vmatprep.subr.bf16.mxu0 0
  %626 = vmatpush1.bf16.msra.mxu0 %v467
  %627 = vmatprep.subr.bf16.mxu0 0
  %628 = vmatpush1.bf16.msra.mxu0 %v468
  %629 = vmatprep.subr.bf16.mxu0 0
  %630 = vmatpush1.bf16.msra.mxu0 %v469
  %631 = vmatprep.subr.bf16.mxu0 0
  %632 = vmatpush1.bf16.msra.mxu0 %v470
  %633 = vmatprep.subr.bf16.mxu0 0
  %634 = vmatpush1.bf16.msra.mxu0 %v471
  %635 = vmatprep.subr.bf16.mxu0 0
  %636 = vmatpush1.bf16.msra.mxu0 %v472
  %637 = vmatprep.subr.bf16.mxu0 0
  %638 = vmatpush1.bf16.msra.mxu0 %v473
  %639 = vmatprep.subr.bf16.mxu0 0
  %640 = vmatpush1.bf16.msra.mxu0 %v474
  %641 = vmatprep.subr.bf16.mxu0 0
  %642 = vmatpush1.bf16.msra.mxu0 %v475
  %643 = vmatprep.subr.bf16.mxu0 0
  %644 = vmatpush1.bf16.msra.mxu0 %v476
  %645 = vmatprep.mubr.bf16.mxu0 %v176
  %646 = vmatmul.mubr.bf16.gmra.mrb[0].mxu0 %v175
  %v647 = vpop.f32.mrb[0].mxu0
  %v648 = vadd.f32 %v608, %v647
  %v649 = vpop.f32.mrb[0].mxu0
  %v650 = vpop.f32.mrb[0].mxu0
  %v651 = vpop.f32.mrb[0].mxu0
  %652 = vdwg.mxu0
  %653 = vmatprep.subr.bf16.mxu0 0
  %654 = vmatpush1.bf16.msra.mxu0 %v477
  %655 = vmatprep.subr.bf16.mxu0 0
  %656 = vmatpush1.bf16.msra.mxu0 %v478
  %657 = vmatprep.subr.bf16.mxu0 0
  %658 = vmatpush1.bf16.msra.mxu0 %v479
  %659 = vmatprep.subr.bf16.mxu0 0
  %660 = vmatpush1.bf16.msra.mxu0 %v480
  %661 = vmatprep.subr.bf16.mxu0 0
  %662 = vmatpush1.bf16.msra.mxu0 %v481
  %663 = vmatprep.subr.bf16.mxu0 0
  %664 = vmatpush1.bf16.msra.mxu0 %v482
  %665 = vmatprep.subr.bf16.mxu0 0
  %666 = vmatpush1.bf16.msra.mxu0 %v483
  %667 = vmatprep.subr.bf16.mxu0 0
  %668 = vmatpush1.bf16.msra.mxu0 %v484
  %669 = vmatprep.subr.bf16.mxu0 0
  %670 = vmatpush1.bf16.msra.mxu0 %v485
  %671 = vmatprep.subr.bf16.mxu0 0
  %672 = vmatpush1.bf16.msra.mxu0 %v486
  %673 = vmatprep.subr.bf16.mxu0 0
  %674 = vmatpush1.bf16.msra.mxu0 %v487
  %675 = vmatprep.subr.bf16.mxu0 0
  %676 = vmatpush1.bf16.msra.mxu0 %v488
  %677 = vmatprep.subr.bf16.mxu0 0
  %678 = vmatpush1.bf16.msra.mxu0 %v489
  %679 = vmatprep.subr.bf16.mxu0 0
  %680 = vmatpush1.bf16.msra.mxu0 %v490
  %681 = vmatprep.subr.bf16.mxu0 0
  %682 = vmatpush1.bf16.msra.mxu0 %v491
  %683 = vmatprep.subr.bf16.mxu0 0
  %684 = vmatpush1.bf16.msra.mxu0 %v492
  %685 = vmatprep.mubr.bf16.mxu0 %v178
  %686 = vmatmul.mubr.bf16.gmra.mrb[0].mxu0 %v177
  %v687 = vpop.f32.mrb[0].mxu0
  %v688 = vadd.f32 %v648, %v687
  %v689 = vpop.f32.mrb[0].mxu0
  %v690 = vpop.f32.mrb[0].mxu0
  %v691 = vpop.f32.mrb[0].mxu0
  %692 = vdwg.mxu0
  %693 = vmatprep.subr.bf16.mxu0 0
  %694 = vmatpush1.bf16.msra.mxu0 %v493
  %695 = vmatprep.subr.bf16.mxu0 0
  %696 = vmatpush1.bf16.msra.mxu0 %v494
  %697 = vmatprep.subr.bf16.mxu0 0
  %698 = vmatpush1.bf16.msra.mxu0 %v495
  %699 = vmatprep.subr.bf16.mxu0 0
  %700 = vmatpush1.bf16.msra.mxu0 %v496
  %701 = vmatprep.subr.bf16.mxu0 0
  %702 = vmatpush1.bf16.msra.mxu0 %v497
  %703 = vmatprep.subr.bf16.mxu0 0
  %704 = vmatpush1.bf16.msra.mxu0 %v498
  %705 = vmatprep.subr.bf16.mxu0 0
  %706 = vmatpush1.bf16.msra.mxu0 %v499
  %707 = vmatprep.subr.bf16.mxu0 0
  %708 = vmatpush1.bf16.msra.mxu0 %v500
  %709 = vmatprep.subr.bf16.mxu0 0
  %710 = vmatpush1.bf16.msra.mxu0 %v501
  %711 = vmatprep.subr.bf16.mxu0 0
  %712 = vmatpush1.bf16.msra.mxu0 %v502
  %713 = vmatprep.subr.bf16.mxu0 0
  %714 = vmatpush1.bf16.msra.mxu0 %v503
  %715 = vmatprep.subr.bf16.mxu0 0
  %716 = vmatpush1.bf16.msra.mxu0 %v504
  %717 = vmatprep.subr.bf16.mxu0 0
  %718 = vmatpush1.bf16.msra.mxu0 %v505
  %719 = vmatprep.subr.bf16.mxu0 0
  %720 = vmatpush1.bf16.msra.mxu0 %v506
  %721 = vmatprep.subr.bf16.mxu0 0
  %722 = vmatpush1.bf16.msra.mxu0 %v507
  %723 = vmatprep.subr.bf16.mxu0 0
  %724 = vmatpush1.bf16.msra.mxu0 %v508
  %725 = vmatprep.mubr.bf16.mxu0 %v180
  %726 = vmatmul.mubr.bf16.gmra.mrb[0].mxu0 %v179
  %v727 = vpop.f32.mrb[0].mxu0
  %v728 = vadd.f32 %v688, %v727
  %v729 = vpop.f32.mrb[0].mxu0
  %v730 = vpop.f32.mrb[0].mxu0
  %v731 = vpop.f32.mrb[0].mxu0
  %732 = vdwg.mxu0
  %v733 = vadd.f32 %v28, %v728
  %734 = vst [vmem:[#allocation2] sm:$0xff] %v733
  // Predicated region
  $region26: #{promoter_cnn_forward.3} parent=0 // pred_check
    %p735 = pneg %p23
  $region27: #{promoter_cnn_forward.3} parent=0 // pred_check_branch
    %737 = sbr.rel (%p735) target = $region29
  $region28: #{promoter_cnn_forward.3} parent=0 // pred_region
    %v738 = vld [vmem:[#allocation2] sm:$0xff]
    %v739 = vld [vmem:[%s2] sm:$0x1]
    %v741 = vlaneseq
    %v742 = vshrl.u32 %v741, 7
    %v743 = vsub.s32 0, %v742
    %v744 = vrot.slane %v739, %v743
    %v746 = vadd.f32 %v738, %v744
    %v747 = vmax.f32 %v746, 0.0
    %v748 = vld [vmem:[%s3] sm:$0x1]
    %v750 = vlaneseq
    %v751 = vshrl.u32 %v750, 7
    %v752 = vsub.s32 0, %v751
    %v753 = vrot.slane %v748, %v752
    %v755 = vmul.f32 %v747, %v753
    %756 = vadd.xlane.f32.xlu0 %v755
    %v757 = vpop.xlane.xlu0 %756
    %v758 = vld [vmem:[#allocation3] sm:$0x1]
    %v760 = vlaneseq
    %v761 = vshrl.u32 %v760, 7
    %v762 = vsub.s32 0, %v761
    %v763 = vrot.slane %v758, %v762
    %v765 = vadd.f32 %v757, %v763
    %v766 = vxor.u32 %v765, 2147483648
    %v767 = vmul.f32 %v766, 1.442695
    %v768 = vpow.pop %v767
    %v769 = vadd.f32 %v768, 1.0
    %v770 = vrcp.pop %v769
    %v771 = vmul.f32 1.0, %v770
    %vm772 = vcmask 7168
    %773 = vst.msk [vmem:[%s5] sm:$0xff] %vm772, %v771
  $region29: #{promoter_cnn_forward.3} parent=0 // pred_fallthru
    _
  // Predicated region
  $region30: #{promoter_cnn_forward.3} parent=0 // pred_check
    _
  $region31: #{promoter_cnn_forward.3} parent=0 // pred_check_branch
    %775 = sbr.rel (0) target = $region33
  $region32: #{promoter_cnn_forward.3} parent=0 // pred_region
    _
  $region33: #{promoter_cnn_forward.3} parent=0 // pred_fallthru
    _
  // Predicated region
  $region34: #{promoter_cnn_forward.3} parent=0 // pred_check
    _
  $region35: #{promoter_cnn_forward.3} parent=0 // pred_check_branch
    %777 = sbr.rel (0) target = $region37
  $region36: #{promoter_cnn_forward.3} parent=0 // pred_region
    _
  $region37: #{promoter_cnn_forward.3} parent=0 // pred_fallthru
    _

// kernel: promoter_cnn_forward.2
$region0: #{promoter_cnn_forward.2}
  #allocation0 [shape = 'u32[]', space=smem, size = 0x4, offset = 0x4, fixed_abs, tag = 'smem constant byte address 0x4 - core index']
  #allocation1 [shape = 'u32[144,128]{1,0:T(1,128)}', space=vmem, size = 0x12000, scoped, tag = 'internal scratch']
  #allocation2 [shape = 'f32[10,512]{1,0:T(8,128)}', space=vmem, size = 0x8000, scoped, tag = 'scratch operand']
  %s0 = inlined_call_operand.vmem [shape: bf16[2,8,48], index: 0, kind: input, shape index: {}]
  %s1 = inlined_call_operand.vmem [shape: bf16[48,1024], index: 1, kind: input, shape index: {}]
  %s2 = inlined_call_operand.vmem [shape: f32[1,1024], index: 2, kind: input, shape index: {}]
  %s3 = inlined_call_operand.hbm [shape: bf16[3,512,256], index: 3, kind: input, shape index: {}]
  %s4 = inlined_call_operand.vmem [shape: f32[1,256], index: 4, kind: input, shape index: {}]
  %s5 = inlined_call_operand.vmem [shape: bf16[2,8,128], index: 5, kind: output, shape index: {}]
  %s6 = sld [smem:[#allocation0]]
  $region57: #{promoter_cnn_forward.2} parent=0
    _
  %s8 = ssub.s32 1, %s6
  %s9 = scalar_select 0, %s8, %s6
  $region1: #{promoter_cnn_forward.2} parent=0
    #allocation3 [shape = 'u8[786432]{0}', space=vmem, size = 0xc0000, scoped, tag = 'input window, operand 3, single buffered']
    #allocation4 [shape = 's32[2]{0}', space=sflag, size = 0x8, scoped, tag = 'scoped memory for promoter_cnn_forward.2']
    %10 = vsyncpa [#allocation4], 0
    loop: start=0, step=1, limit=4
    $region2: #{promoter_cnn_forward.2} parent=1 // loop_pre_header
      _
    $region3: #{promoter_cnn_forward.2} parent=1 // loop_header
      %s12 = sphi 0, %s16
      %p13 = scmp.ge.s32.totalorder %s12, 4
      %s22 = sphi 0, %s24
      %s25 = sphi 0, %s22
      %s26 = sphi 0, %s25
      %s42 = sphi 0, %s26
      %s46 = sphi 0, %s46
      %s48 = sphi 0, %s46
      %s49 = sphi 0, %s48
      %s63 = sphi 0, %s49
      %s67 = sphi 0, %s67
      %s69 = sphi 0, %s67
      %s70 = sphi 0, %s69
      %s84 = sphi 0, %s70
      %s88 = sphi 0, %s88
      %s90 = sphi 0, %s88
      %s91 = sphi 0, %s90
      %s105 = sphi 0, %s91
      %s109 = sphi 0, %s109
      %s111 = sphi 0, %s109
      %s112 = sphi 0, %s111
      %s126 = sphi 0, %s112
      %s132 = sphi 0, %s134
      %s135 = sphi 0, %s132
      %s136 = sphi 0, %s135
      %s152 = sphi 0, %s136
    $region4: #{promoter_cnn_forward.2} parent=1 // loop_header_branch
      %15 = sbr.rel (%p13) target = $region8
    $region5: #{promoter_cnn_forward.2} parent=1 // loop_body
      %s17 = ssub.s32 %s12, 1
      %s18 = ssub.s32 %s12, 2
      %s19 = sadd.s32 %s12, 1
      %s20 = ssub.s32 %s12, %s19
      %p21 = scmp.eq.s32.totalorder %s20, 0
      %s23 = sadd.s32 %s22, 1
      %s24 = scalar_select %p21, %s22, %s23
      %p27 = pneg %p21
      %p28 = scmp.eq.s32.totalorder %s12, 1
      %p29 = por %p27, %p28
      %p30 = scmp.ne.s32.totalorder %s22, %s25
      %p31 = scmp.eq.s32.totalorder %s12, 0
      %p32 = por %p30, %p31
      %p33 = scmp.ne.s32.totalorder %s22, %s25
      %p34 = scmp.eq.s32.totalorder %s17, 1
      %p35 = por %p33, %p34
      %p36 = scmp.ne.s32.totalorder %s25, %s26
      %p37 = scmp.eq.s32.totalorder %s17, 0
      %p38 = por %p36, %p37
      %p39 = scmp.ne.s32.totalorder %s25, %s26
      %p40 = scmp.eq.s32.totalorder %s18, 1
      %p41 = por %p39, %p40
      %p43 = scmp.ne.s32.totalorder %s26, %s42
      %p44 = scmp.eq.s32.totalorder %s18, 0
      %p45 = por %p43, %p44
      %s47 = sadd.s32 %s46, 1
      %p50 = scmp.eq.s32.totalorder %s12, 1
      %p51 = scmp.ne.s32.totalorder %s46, %s48
      %p52 = scmp.eq.s32.totalorder %s12, 0
      %p53 = por %p51, %p52
      %p54 = scmp.ne.s32.totalorder %s46, %s48
      %p55 = scmp.eq.s32.totalorder %s17, 1
      %p56 = por %p54, %p55
      %p57 = scmp.ne.s32.totalorder %s48, %s49
      %p58 = scmp.eq.s32.totalorder %s17, 0
      %p59 = por %p57, %p58
      %p60 = scmp.ne.s32.totalorder %s48, %s49
      %p61 = scmp.eq.s32.totalorder %s18, 1
      %p62 = por %p60, %p61
      %p64 = scmp.ne.s32.totalorder %s49, %s63
      %p65 = scmp.eq.s32.totalorder %s18, 0
      %p66 = por %p64, %p65
      %s68 = sadd.s32 %s67, 1
      %p71 = scmp.eq.s32.totalorder %s12, 1
      %p72 = scmp.ne.s32.totalorder %s67, %s69
      %p73 = scmp.eq.s32.totalorder %s12, 0
      %p74 = por %p72, %p73
      %p75 = scmp.ne.s32.totalorder %s67, %s69
      %p76 = scmp.eq.s32.totalorder %s17, 1
      %p77 = por %p75, %p76
      %p78 = scmp.ne.s32.totalorder %s69, %s70
      %p79 = scmp.eq.s32.totalorder %s17, 0
      %p80 = por %p78, %p79
      %p81 = scmp.ne.s32.totalorder %s69, %s70
      %p82 = scmp.eq.s32.totalorder %s18, 1
      %p83 = por %p81, %p82
      %p85 = scmp.ne.s32.totalorder %s70, %s84
      %p86 = scmp.eq.s32.totalorder %s18, 0
      %p87 = por %p85, %p86
      %s89 = sadd.s32 %s88, 1
      %p92 = scmp.eq.s32.totalorder %s12, 1
      %p93 = scmp.ne.s32.totalorder %s88, %s90
      %p94 = scmp.eq.s32.totalorder %s12, 0
      %p95 = por %p93, %p94
      %p96 = scmp.ne.s32.totalorder %s88, %s90
      %p97 = scmp.eq.s32.totalorder %s17, 1
      %p98 = por %p96, %p97
      %p99 = scmp.ne.s32.totalorder %s90, %s91
      %p100 = scmp.eq.s32.totalorder %s17, 0
      %p101 = por %p99, %p100
      %p102 = scmp.ne.s32.totalorder %s90, %s91
      %p103 = scmp.eq.s32.totalorder %s18, 1
      %p104 = por %p102, %p103
      %p106 = scmp.ne.s32.totalorder %s91, %s105
      %p107 = scmp.eq.s32.totalorder %s18, 0
      %p108 = por %p106, %p107
      %s110 = sadd.s32 %s109, 1
      %p113 = scmp.eq.s32.totalorder %s12, 1
      %p114 = scmp.ne.s32.totalorder %s109, %s111
      %p115 = scmp.eq.s32.totalorder %s12, 0
      %p116 = por %p114, %p115
      %p117 = scmp.ne.s32.totalorder %s109, %s111
      %p118 = scmp.eq.s32.totalorder %s17, 1
      %p119 = por %p117, %p118
      %p120 = scmp.ne.s32.totalorder %s111, %s112
      %p121 = scmp.eq.s32.totalorder %s17, 0
      %p122 = por %p120, %p121
      %p123 = scmp.ne.s32.totalorder %s111, %s112
      %p124 = scmp.eq.s32.totalorder %s18, 1
      %p125 = por %p123, %p124
      %p127 = scmp.ne.s32.totalorder %s112, %s126
      %p128 = scmp.eq.s32.totalorder %s18, 0
      %p129 = por %p127, %p128
      %s130 = ssub.s32 %s12, %s19
      %p131 = scmp.eq.s32.totalorder %s130, 0
      %s133 = sadd.s32 %s132, 1
      %s134 = scalar_select %p131, %s132, %s133
      %p137 = pneg %p131
      %p138 = scmp.eq.s32.totalorder %s12, 1
      %p139 = por %p137, %p138
      %p140 = scmp.ne.s32.totalorder %s132, %s135
      %p141 = scmp.eq.s32.totalorder %s12, 0
      %p142 = por %p140, %p141
      %p143 = scmp.ne.s32.totalorder %s132, %s135
      %p144 = scmp.eq.s32.totalorder %s17, 1
      %p145 = por %p143, %p144
      %p146 = scmp.ne.s32.totalorder %s135, %s136
      %p147 = scmp.eq.s32.totalorder %s17, 0
      %p148 = por %p146, %p147
      %p149 = scmp.ne.s32.totalorder %s135, %s136
      %p150 = scmp.eq.s32.totalorder %s18, 1
      %p151 = por %p149, %p150
      %p153 = scmp.ne.s32.totalorder %s136, %s152
      %p154 = scmp.eq.s32.totalorder %s18, 0
      %p155 = por %p153, %p154
      %p156 = scmp.le.s32.totalorder 1, %s12
      %p157 = scmp.lt.s32.totalorder %s12, 3
      %p158 = pnand %p156, %p157
      %p159 = pneg %p158
      // Predicated region
      $region9: #{promoter_cnn_forward.2} parent=5 // pred_check
        _
      $region10: #{promoter_cnn_forward.2} parent=5 // pred_check_branch
        %161 = sbr.rel (%p158) target = $region12
      $region11: #{promoter_cnn_forward.2} parent=5 // pred_region
        %s162 = ssub.s32 %s12, 1
        // Predicated region
        $region13: #{promoter_cnn_forward.2} parent=11 // pred_check
          %p163 = pneg %p59
        $region14: #{promoter_cnn_forward.2} parent=11 // pred_check_branch
          %165 = sbr.rel (%p163) target = $region16
        $region15: #{promoter_cnn_forward.2} parent=11 // pred_region
          _
        $region16: #{promoter_cnn_forward.2} parent=11 // pred_fallthru
          _
        // Predicated region
        $region17: #{promoter_cnn_forward.2} parent=11 // pred_check
          %p166 = pneg %p80
        $region18: #{promoter_cnn_forward.2} parent=11 // pred_check_branch
          %168 = sbr.rel (%p166) target = $region20
        $region19: #{promoter_cnn_forward.2} parent=11 // pred_region
          _
        $region20: #{promoter_cnn_forward.2} parent=11 // pred_fallthru
          _
        // Predicated region
        $region21: #{promoter_cnn_forward.2} parent=11 // pred_check
          %p169 = pneg %p101
        $region22: #{promoter_cnn_forward.2} parent=11 // pred_check_branch
          %171 = sbr.rel (%p169) target = $region24
        $region23: #{promoter_cnn_forward.2} parent=11 // pred_region
          %s173 = ssub.s32 24576, 24576
          %174 = vsyncadd [#allocation4], %s173
          %s175 = sshll.u32 [#allocation3], 4
          %s176 = int_to_ptr.vmem [resolvable:$true] %s175
          %181 = dma.hbm_to_vmem [thread:$0]  %s3, 24576, %s176, [#allocation4], 128, 128, 8
        $region24: #{promoter_cnn_forward.2} parent=11 // pred_fallthru
          _
        // Predicated region
        $region25: #{promoter_cnn_forward.2} parent=11 // pred_check
          %p182 = pneg %p122
        $region26: #{promoter_cnn_forward.2} parent=11 // pred_check_branch
          %184 = sbr.rel (%p182) target = $region28
        $region27: #{promoter_cnn_forward.2} parent=11 // pred_region
          _
        $region28: #{promoter_cnn_forward.2} parent=11 // pred_fallthru
          _
      $region12: #{promoter_cnn_forward.2} parent=5 // pred_fallthru
        _
      %p185 = scmp.lt.s32.totalorder %s12, 2
      // Predicated region
      $region29: #{promoter_cnn_forward.2} parent=5 // pred_check
        %p186 = pneg %p185
      $region30: #{promoter_cnn_forward.2} parent=5 // pred_check_branch
        %188 = sbr.rel (%p186) target = $region32
      $region31: #{promoter_cnn_forward.2} parent=5 // pred_region
        // Predicated region
        $region33: #{promoter_cnn_forward.2} parent=31 // pred_check
          %p189 = pneg %p32
        $region34: #{promoter_cnn_forward.2} parent=31 // pred_check_branch
          %191 = sbr.rel (%p189) target = $region36
        $region35: #{promoter_cnn_forward.2} parent=31 // pred_region
          %p192 = scmp.lt.s32.totalorder %s12, 1
          %s193 = scalar_select %p192, %s12, 1
          %s194 = smul.addr %s193, 4
          %s195 = scalar_lea.vmem %s0, %s194
        $region36: #{promoter_cnn_forward.2} parent=31 // pred_fallthru
          _
      $region32: #{promoter_cnn_forward.2} parent=5 // pred_fallthru
        _
      %p196 = scmp.le.s32.totalorder 1, %s12
      %p197 = scmp.lt.s32.totalorder %s12, 3
      %p198 = pnand %p196, %p197
      %p199 = pneg %p198
      // Predicated region
      $region37: #{promoter_cnn_forward.2} parent=5 // pred_check
        _
      $region38: #{promoter_cnn_forward.2} parent=5 // pred_check_branch
        %201 = sbr.rel (%p198) target = $region40
      $region39: #{promoter_cnn_forward.2} parent=5 // pred_region
        %s202 = ssub.s32 %s12, 1
        // Predicated region
        $region41: #{promoter_cnn_forward.2} parent=39 // pred_check
          %p203 = pneg %p101
        $region42: #{promoter_cnn_forward.2} parent=39 // pred_check_branch
          %205 = sbr.rel (%p203) target = $region44
        $region43: #{promoter_cnn_forward.2} parent=39 // pred_region
          %206 = dma.done [#allocation4], 24576
        $region44: #{promoter_cnn_forward.2} parent=39 // pred_fallthru
          _
        %p207 = scmp.lt.s32.totalorder %s17, 1
        %s208 = scalar_select %p207, %s17, 1
        %s209 = smul.addr %s208, 4
        %s210 = scalar_lea.vmem %s0, %s209
        %p211 = pneg %p38
        %p212 = pneg %p35
        %p213 = pneg %p59
        %p214 = pneg %p56
        %p215 = pneg %p80
        %p216 = pneg %p77
        %p217 = pneg %p101
        %p218 = pneg %p98
        %p219 = pneg %p122
        %p220 = pneg %p119
        %p221 = pneg %p148
        %p222 = pneg %p145
        %p223 = scmp.lt.s32.totalorder %s17, 1
        %s224 = scalar_select %p223, %s17, 1
        %s225 = smul.addr %s224, 4
        %s226 = scalar_lea.vmem %s5, %s225
        %p227 = scmp.lt.s32.totalorder %s17, 1
        %s228 = scalar_select %p227, %s17, 1
        %s229 = smul.addr %s228, 4
        %s230 = scalar_lea.vmem %s0, %s229
        %p231 = scmp.lt.s32.totalorder %s17, 1
        %s232 = scalar_select %p231, %s17, 1
        %s233 = smul.addr %s232, 4
        %s234 = scalar_lea.vmem %s5, %s233
        %v236 = vld [vmem:[%s230] sm:$0xf]
        %v237 = vld [vmem:[%s1] sm:$0xff]
        %v238 = vld [vmem:[%s1 + $0x8] sm:$0xff]
        %v239 = vld [vmem:[%s1 + $0x10] sm:$0xff]
        %v240 = vld [vmem:[%s1 + $0x18] sm:$0xff]
        %v241 = vld [vmem:[%s1 + $0x20] sm:$0xff]
        %v242 = vld [vmem:[%s1 + $0x28] sm:$0xff]
        %v243 = vld [vmem:[%s1 + $0x30] sm:$0xff]
        %v244 = vld [vmem:[%s1 + $0x38] sm:$0xff]
        %v245 = vld [vmem:[%s1 + $0x40] sm:$0xff]
        %v246 = vld [vmem:[%s1 + $0x48] sm:$0xff]
        %v247 = vld [vmem:[%s1 + $0x50] sm:$0xff]
        %v248 = vld [vmem:[%s1 + $0x58] sm:$0xff]
        %v249 = vld [vmem:[%s1 + $0x60] sm:$0xff]
        %v250 = vld [vmem:[%s1 + $0x68] sm:$0xff]
        %v251 = vld [vmem:[%s1 + $0x70] sm:$0xff]
        %v252 = vld [vmem:[%s1 + $0x78] sm:$0xff]
        %v253 = vld [vmem:[%s1 + $0x80] sm:$0xff]
        %v254 = vld [vmem:[%s1 + $0x88] sm:$0xff]
        %v255 = vld [vmem:[%s1 + $0x90] sm:$0xff]
        %v256 = vld [vmem:[%s1 + $0x98] sm:$0xff]
        %v257 = vld [vmem:[%s1 + $0xa0] sm:$0xff]
        %v258 = vld [vmem:[%s1 + $0xa8] sm:$0xff]
        %v259 = vld [vmem:[%s1 + $0xb0] sm:$0xff]
        %v260 = vld [vmem:[%s1 + $0xb8] sm:$0xff]
        %v261 = vld [vmem:[%s2] sm:$0xff]
        %v263 = vlaneseq
        %v264 = vshrl.u32 %v263, 7
        %v265 = vsub.s32 0, %v264
        %v266 = vrot.slane %v261, %v265
        %v267 = vlaneseq
        %v268 = vshrl.u32 %v267, 7
        %v269 = vsub.s32 1, %v268
        %v270 = vrot.slane %v261, %v269
        %v271 = vlaneseq
        %v272 = vshrl.u32 %v271, 7
        %v273 = vsub.s32 2, %v272
        %v274 = vrot.slane %v261, %v273
        %v275 = vlaneseq
        %v276 = vshrl.u32 %v275, 7
        %v277 = vsub.s32 3, %v276
        %v278 = vrot.slane %v261, %v277
        %v279 = vlaneseq
        %v280 = vshrl.u32 %v279, 7
        %v281 = vsub.s32 4, %v280
        %v282 = vrot.slane %v261, %v281
        %v283 = vlaneseq
        %v284 = vshrl.u32 %v283, 7
        %v285 = vsub.s32 5, %v284
        %v286 = vrot.slane %v261, %v285
        %v287 = vlaneseq
        %v288 = vshrl.u32 %v287, 7
        %v289 = vsub.s32 6, %v288
        %v290 = vrot.slane %v261, %v289
        %v291 = vlaneseq
        %v292 = vshrl.u32 %v291, 7
        %v293 = vsub.s32 7, %v292
        %v294 = vrot.slane %v261, %v293
        %v327 = vunpack.c.l.b16 %v237
        %v328 = vunpack.c.h.b16 %v237
        %v329 = vunpack.c.l.b16 %v238
        %v330 = vunpack.c.h.b16 %v238
        %v331 = vunpack.c.l.b16 %v239
        %v332 = vunpack.c.h.b16 %v239
        %v333 = vunpack.c.l.b16 %v240
        %v334 = vunpack.c.h.b16 %v240
        %v335 = vunpack.c.l.b16 %v241
        %v336 = vunpack.c.h.b16 %v241
        %v337 = vunpack.c.l.b16 %v242
        %v338 = vunpack.c.h.b16 %v242
        %v339 = vunpack.c.l.b16 %v243
        %v340 = vunpack.c.h.b16 %v243
        %v341 = vunpack.c.l.b16 %v244
        %v342 = vunpack.c.h.b16 %v244
        %v343 = vunpack.c.l.b16 %v245
        %v344 = vunpack.c.h.b16 %v245
        %v345 = vunpack.c.l.b16 %v246
        %v346 = vunpack.c.h.b16 %v246
        %v347 = vunpack.c.l.b16 %v247
        %v348 = vunpack.c.h.b16 %v247
        %v349 = vunpack.c.l.b16 %v248
        %v350 = vunpack.c.h.b16 %v248
        %v351 = vunpack.c.l.b16 %v249
        %v352 = vunpack.c.h.b16 %v249
        %v353 = vunpack.c.l.b16 %v250
        %v354 = vunpack.c.h.b16 %v250
        %v355 = vunpack.c.l.b16 %v251
        %v356 = vunpack.c.h.b16 %v251
        %v357 = vunpack.c.l.b16 %v252
        %v358 = vunpack.c.h.b16 %v252
        %v359 = vunpack.c.l.b16 %v253
        %v360 = vunpack.c.h.b16 %v253
        %v361 = vunpack.c.l.b16 %v254
        %v362 = vunpack.c.h.b16 %v254
        %v363 = vunpack.c.l.b16 %v255
        %v364 = vunpack.c.h.b16 %v255
        %v365 = vunpack.c.l.b16 %v256
        %v366 = vunpack.c.h.b16 %v256
        %v367 = vunpack.c.l.b16 %v257
        %v368 = vunpack.c.h.b16 %v257
        %v369 = vunpack.c.l.b16 %v258
        %v370 = vunpack.c.h.b16 %v258
        %v371 = vunpack.c.l.b16 %v259
        %v372 = vunpack.c.h.b16 %v259
        %v373 = vunpack.c.l.b16 %v260
        %v374 = vunpack.c.h.b16 %v260
        %v375 = vpack.c.b16 %v335, %v327
        %v376 = vpack.c.b16 %v336, %v328
        %v377 = vpack.c.b16 %v337, %v329
        %v378 = vpack.c.b16 %v338, %v330
        %v379 = vpack.c.b16 %v339, %v331
        %v380 = vpack.c.b16 %v340, %v332
        %v381 = vpack.c.b16 %v341, %v333
        %v382 = vpack.c.b16 %v342, %v334
        %v383 = vpack.c.b16 %v351, %v343
        %v384 = vpack.c.b16 %v352, %v344
        %v385 = vpack.c.b16 %v353, %v345
        %v386 = vpack.c.b16 %v354, %v346
        %v387 = vpack.c.b16 %v355, %v347
        %v388 = vpack.c.b16 %v356, %v348
        %v389 = vpack.c.b16 %v357, %v349
        %v390 = vpack.c.b16 %v358, %v350
        %v391 = vpack.c.b16 %v367, %v359
        %v392 = vpack.c.b16 %v368, %v360
        %v393 = vpack.c.b16 %v369, %v361
        %v394 = vpack.c.b16 %v370, %v362
        %v395 = vpack.c.b16 %v371, %v363
        %v396 = vpack.c.b16 %v372, %v364
        %v397 = vpack.c.b16 %v373, %v365
        %v398 = vpack.c.b16 %v374, %v366
        %vm423 = vcmask 392192
        %v425 = vsel %vm423, %v236, 0
        %427 = vmatprep.subr.bf16.mxu0 %v376
        %428 = vmatpush1.bf16.msra.mxu0 %v375
        %429 = vmatprep.subr.bf16.mxu0 %v384
        %430 = vmatpush1.bf16.msra.mxu0 %v383
        %431 = vmatprep.subr.bf16.mxu0 %v392
        %432 = vmatpush1.bf16.msra.mxu0 %v391
        %433 = vmatprep.subr.bf16.mxu0 0
        %434 = vmatpush1.bf16.msra.mxu0 0
        %435 = vmatprep.subr.bf16.mxu0 0
        %436 = vmatpush1.bf16.msra.mxu0 0
        %437 = vmatprep.subr.bf16.mxu0 0
        %438 = vmatpush1.bf16.msra.mxu0 0
        %439 = vmatprep.subr.bf16.mxu0 0
        %440 = vmatpush1.bf16.msra.mxu0 0
        %441 = vmatprep.subr.bf16.mxu0 0
        %442 = vmatpush1.bf16.msra.mxu0 0
        %443 = vmatprep.subr.bf16.mxu0 0
        %444 = vmatpush1.bf16.msra.mxu0 0
        %445 = vmatprep.subr.bf16.mxu0 0
        %446 = vmatpush1.bf16.msra.mxu0 0
        %447 = vmatprep.subr.bf16.mxu0 0
        %448 = vmatpush1.bf16.msra.mxu0 0
        %449 = vmatprep.subr.bf16.mxu0 0
        %450 = vmatpush1.bf16.msra.mxu0 0
        %451 = vmatprep.subr.bf16.mxu0 0
        %452 = vmatpush1.bf16.msra.mxu0 0
        %453 = vmatprep.subr.bf16.mxu0 0
        %454 = vmatpush1.bf16.msra.mxu0 0
        %455 = vmatprep.subr.bf16.mxu0 0
        %456 = vmatpush1.bf16.msra.mxu0 0
        %457 = vmatprep.subr.bf16.mxu0 0
        %458 = vmatpush1.bf16.msra.mxu0 0
        %459 = vmatprep.mubr.bf16.mxu0 0
        %460 = vmatmul.mubr.bf16.gmra.mrb[0].mxu0 %v425
        %v461 = vpop.f32.mrb[0].mxu0
        %v462 = vadd.f32 %v266, %v461
        %v463 = vpop.f32.mrb[0].mxu0
        %v464 = vadd.f32 %v270, %v463
        %v465 = vpop.f32.mrb[0].mxu0
        %v466 = vpop.f32.mrb[0].mxu0
        %467 = vdwg.mxu0
        %468 = vmatprep.subr.bf16.mxu0 %v378
        %469 = vmatpush1.bf16.msra.mxu0 %v377
        %470 = vmatprep.subr.bf16.mxu0 %v386
        %471 = vmatpush1.bf16.msra.mxu0 %v385
        %472 = vmatprep.subr.bf16.mxu0 %v394
        %473 = vmatpush1.bf16.msra.mxu0 %v393
        %474 = vmatprep.subr.bf16.mxu0 0
        %475 = vmatpush1.bf16.msra.mxu0 0
        %476 = vmatprep.subr.bf16.mxu0 0
        %477 = vmatpush1.bf16.msra.mxu0 0
        %478 = vmatprep.subr.bf16.mxu0 0
        %479 = vmatpush1.bf16.msra.mxu0 0
        %480 = vmatprep.subr.bf16.mxu0 0
        %481 = vmatpush1.bf16.msra.mxu0 0
        %482 = vmatprep.subr.bf16.mxu0 0
        %483 = vmatpush1.bf16.msra.mxu0 0
        %484 = vmatprep.subr.bf16.mxu0 0
        %485 = vmatpush1.bf16.msra.mxu0 0
        %486 = vmatprep.subr.bf16.mxu0 0
        %487 = vmatpush1.bf16.msra.mxu0 0
        %488 = vmatprep.subr.bf16.mxu0 0
        %489 = vmatpush1.bf16.msra.mxu0 0
        %490 = vmatprep.subr.bf16.mxu0 0
        %491 = vmatpush1.bf16.msra.mxu0 0
        %492 = vmatprep.subr.bf16.mxu0 0
        %493 = vmatpush1.bf16.msra.mxu0 0
        %494 = vmatprep.subr.bf16.mxu0 0
        %495 = vmatpush1.bf16.msra.mxu0 0
        %496 = vmatprep.subr.bf16.mxu0 0
        %497 = vmatpush1.bf16.msra.mxu0 0
        %498 = vmatprep.subr.bf16.mxu0 0
        %499 = vmatpush1.bf16.msra.mxu0 0
        %500 = vmatprep.mubr.bf16.mxu0 0
        %501 = vmatmul.mubr.bf16.gmra.mrb[0].mxu0 %v425
        %v502 = vpop.f32.mrb[0].mxu0
        %v503 = vadd.f32 %v274, %v502
        %v504 = vpop.f32.mrb[0].mxu0
        %v505 = vadd.f32 %v278, %v504
        %v506 = vpop.f32.mrb[0].mxu0
        %v507 = vpop.f32.mrb[0].mxu0
        %508 = vdwg.mxu0
        %509 = vmatprep.subr.bf16.mxu0 %v380
        %510 = vmatpush1.bf16.msra.mxu0 %v379
        %511 = vmatprep.subr.bf16.mxu0 %v388
        %512 = vmatpush1.bf16.msra.mxu0 %v387
        %513 = vmatprep.subr.bf16.mxu0 %v396
        %514 = vmatpush1.bf16.msra.mxu0 %v395
        %515 = vmatprep.subr.bf16.mxu0 0
        %516 = vmatpush1.bf16.msra.mxu0 0
        %517 = vmatprep.subr.bf16.mxu0 0
        %518 = vmatpush1.bf16.msra.mxu0 0
        %519 = vmatprep.subr.bf16.mxu0 0
        %520 = vmatpush1.bf16.msra.mxu0 0
        %521 = vmatprep.subr.bf16.mxu0 0
        %522 = vmatpush1.bf16.msra.mxu0 0
        %523 = vmatprep.subr.bf16.mxu0 0
        %524 = vmatpush1.bf16.msra.mxu0 0
        %525 = vmatprep.subr.bf16.mxu0 0
        %526 = vmatpush1.bf16.msra.mxu0 0
        %527 = vmatprep.subr.bf16.mxu0 0
        %528 = vmatpush1.bf16.msra.mxu0 0
        %529 = vmatprep.subr.bf16.mxu0 0
        %530 = vmatpush1.bf16.msra.mxu0 0
        %531 = vmatprep.subr.bf16.mxu0 0
        %532 = vmatpush1.bf16.msra.mxu0 0
        %533 = vmatprep.subr.bf16.mxu0 0
        %534 = vmatpush1.bf16.msra.mxu0 0
        %535 = vmatprep.subr.bf16.mxu0 0
        %536 = vmatpush1.bf16.msra.mxu0 0
        %537 = vmatprep.subr.bf16.mxu0 0
        %538 = vmatpush1.bf16.msra.mxu0 0
        %539 = vmatprep.subr.bf16.mxu0 0
        %540 = vmatpush1.bf16.msra.mxu0 0
        %541 = vmatprep.mubr.bf16.mxu0 0
        %542 = vmatmul.mubr.bf16.gmra.mrb[0].mxu0 %v425
        %v543 = vpop.f32.mrb[0].mxu0
        %v544 = vadd.f32 %v282, %v543
        %v545 = vpop.f32.mrb[0].mxu0
        %v546 = vadd.f32 %v286, %v545
        %v547 = vpop.f32.mrb[0].mxu0
        %v548 = vpop.f32.mrb[0].mxu0
        %549 = vdwg.mxu0
        %550 = vmatprep.subr.bf16.mxu0 %v382
        %551 = vmatpush1.bf16.msra.mxu0 %v381
        %552 = vmatprep.subr.bf16.mxu0 %v390
        %553 = vmatpush1.bf16.msra.mxu0 %v389
        %554 = vmatprep.subr.bf16.mxu0 %v398
        %555 = vmatpush1.bf16.msra.mxu0 %v397
        %556 = vmatprep.subr.bf16.mxu0 0
        %557 = vmatpush1.bf16.msra.mxu0 0
        %558 = vmatprep.subr.bf16.mxu0 0
        %559 = vmatpush1.bf16.msra.mxu0 0
        %560 = vmatprep.subr.bf16.mxu0 0
        %561 = vmatpush1.bf16.msra.mxu0 0
        %562 = vmatprep.subr.bf16.mxu0 0
        %563 = vmatpush1.bf16.msra.mxu0 0
        %564 = vmatprep.subr.bf16.mxu0 0
        %565 = vmatpush1.bf16.msra.mxu0 0
        %566 = vmatprep.subr.bf16.mxu0 0
        %567 = vmatpush1.bf16.msra.mxu0 0
        %568 = vmatprep.subr.bf16.mxu0 0
        %569 = vmatpush1.bf16.msra.mxu0 0
        %570 = vmatprep.subr.bf16.mxu0 0
        %571 = vmatpush1.bf16.msra.mxu0 0
        %572 = vmatprep.subr.bf16.mxu0 0
        %573 = vmatpush1.bf16.msra.mxu0 0
        %574 = vmatprep.subr.bf16.mxu0 0
        %575 = vmatpush1.bf16.msra.mxu0 0
        %576 = vmatprep.subr.bf16.mxu0 0
        %577 = vmatpush1.bf16.msra.mxu0 0
        %578 = vmatprep.subr.bf16.mxu0 0
        %579 = vmatpush1.bf16.msra.mxu0 0
        %580 = vmatprep.subr.bf16.mxu0 0
        %581 = vmatpush1.bf16.msra.mxu0 0
        %582 = vmatprep.mubr.bf16.mxu0 0
        %583 = vmatmul.mubr.bf16.gmra.mrb[0].mxu0 %v425
        %v584 = vpop.f32.mrb[0].mxu0
        %v585 = vadd.f32 %v290, %v584
        %v586 = vpop.f32.mrb[0].mxu0
        %v587 = vadd.f32 %v294, %v586
        %v588 = vpop.f32.mrb[0].mxu0
        %v589 = vpop.f32.mrb[0].mxu0
        %590 = vdwg.mxu0
        %v591 = vmax.f32 %v462, 0.0
        %v592 = vmax.f32 %v464, 0.0
        %v593 = vmax.f32 %v503, 0.0
        %v594 = vmax.f32 %v505, 0.0
        %v595 = vmax.f32 %v544, 0.0
        %v596 = vmax.f32 %v546, 0.0
        %v597 = vmax.f32 %v585, 0.0
        %v598 = vmax.f32 %v587, 0.0
        %v599 = vmax.f32 %v591, %v595
        %v600 = vmax.f32 %v592, %v596
        %v601 = vmax.f32 %v593, %v597
        %v602 = vmax.f32 %v594, %v598
        %v603 = vlaneseq
        %v604 = vshrl.u32 %v603, 7
        %vm605 = vcmp.lt.s32.totalorder %v604, 4
        %v606 = vsel %vm605, 1, 0
        %vm607 = vcmp.eq.s32.totalorder %v606, 1
        %v608 = vsel %vm607, %v599, 0.0
        %v609 = vsel %vm607, %v600, 0.0
        %v610 = vsel %vm607, %v601, 0.0
        %v611 = vsel %vm607, %v602, 0.0
        %v612 = vlaneseq
        %vm613 = vcmp.ge.s32.totalorder %v612, 0
        %vm614 = vcmp.lt.s32.totalorder %v612, 512
        %vm615 = vmand %vm613, %vm614
        %616 = vst.msk [vmem:[#allocation2] ss:$8 sm:$0xf] %vm615, 0.0
        %617 = vst.msk [vmem:[#allocation2] ss:$8 sm:$0x0] %vm615, 0.0
        %s618 = scalar_lea.vmem [#allocation2], 33
        %619 = vst.msk [vmem:[%s618] ss:$8 sm:$0xf] %vm615, 0.0
        %620 = vst.msk [vmem:[%s618] ss:$8 sm:$0x0] %vm615, 0.0
        %v625 = vrot.slane %v608, 7
        %v626 = vrot.slane %v609, 7
        %v627 = vrot.slane %v610, 7
        %v628 = vrot.slane %v611, 7
        %633 = vst [vmem:[#allocation2] sm:$0xfe] %v625
        %634 = vst [vmem:[#allocation2 + $0x8] sm:$0xfe] %v626
        %635 = vst [vmem:[#allocation2 + $0x10] sm:$0xfe] %v627
        %636 = vst [vmem:[#allocation2 + $0x18] sm:$0xfe] %v628
        %637 = vst [vmem:[#allocation2 + $0x20] sm:$0x1] %v625
        %638 = vst [vmem:[#allocation2 + $0x28] sm:$0x1] %v626
        %639 = vst [vmem:[#allocation2 + $0x30] sm:$0x1] %v627
        %640 = vst [vmem:[#allocation2 + $0x38] sm:$0x1] %v628
        %v641 = vld [vmem:[#allocation2] sm:$0xff]
        %v642 = vld [vmem:[#allocation2 + $0x8] sm:$0xff]
        %v643 = vld [vmem:[#allocation2 + $0x10] sm:$0xff]
        %v644 = vld [vmem:[#allocation2 + $0x18] sm:$0xff]
        %v645 = vpack.c.bf16 %v641, %v641
        %v646 = vpack.c.bf16 %v642, %v642
        %v647 = vpack.c.bf16 %v643, %v643
        %v648 = vpack.c.bf16 %v644, %v644
        %v649 = vld [vmem:[#allocation3] sm:$0xff]
        %v650 = vld [vmem:[#allocation3 + $0x8] sm:$0xff]
        %v651 = vld [vmem:[#allocation3 + $0x10] sm:$0xff]
        %v652 = vld [vmem:[#allocation3 + $0x18] sm:$0xff]
        %v653 = vld [vmem:[#allocation3 + $0x20] sm:$0xff]
        %v654 = vld [vmem:[#allocation3 + $0x28] sm:$0xff]
        %v655 = vld [vmem:[#allocation3 + $0x30] sm:$0xff]
        %v656 = vld [vmem:[#allocation3 + $0x38] sm:$0xff]
        %v657 = vld [vmem:[#allocation3 + $0x40] sm:$0xff]
        %v658 = vld [vmem:[#allocation3 + $0x48] sm:$0xff]
        %v659 = vld [vmem:[#allocation3 + $0x50] sm:$0xff]
        %v660 = vld [vmem:[#allocation3 + $0x58] sm:$0xff]
        %v661 = vld [vmem:[#allocation3 + $0x60] sm:$0xff]
        %v662 = vld [vmem:[#allocation3 + $0x68] sm:$0xff]
        %v663 = vld [vmem:[#allocation3 + $0x70] sm:$0xff]
        %v664 = vld [vmem:[#allocation3 + $0x78] sm:$0xff]
        %v665 = vld [vmem:[#allocation3 + $0x80] sm:$0xff]
        %v666 = vld [vmem:[#allocation3 + $0x88] sm:$0xff]
        %v667 = vld [vmem:[#allocation3 + $0x90] sm:$0xff]
        %v668 = vld [vmem:[#allocation3 + $0x98] sm:$0xff]
        %v669 = vld [vmem:[#allocation3 + $0xa0] sm:$0xff]
        %v670 = vld [vmem:[#allocation3 + $0xa8] sm:$0xff]
        %v671 = vld [vmem:[#allocation3 + $0xb0] sm:$0xff]
        %v672 = vld [vmem:[#allocation3 + $0xb8] sm:$0xff]
        %v673 = vld [vmem:[#allocation3 + $0xc0] sm:$0xff]
        %v674 = vld [vmem:[#allocation3 + $0xc8] sm:$0xff]
        %v675 = vld [vmem:[#allocation3 + $0xd0] sm:$0xff]
        %v676 = vld [vmem:[#allocation3 + $0xd8] sm:$0xff]
        %v677 = vld [vmem:[#allocation3 + $0xe0] sm:$0xff]
        %v678 = vld [vmem:[#allocation3 + $0xe8] sm:$0xff]
        %v679 = vld [vmem:[#allocation3 + $0xf0] sm:$0xff]
        %v680 = vld [vmem:[#allocation3 + $0xf8] sm:$0xff]
        %v681 = vld [vmem:[#allocation3 + $0x100] sm:$0xff]
        %v682 = vld [vmem:[#allocation3 + $0x108] sm:$0xff]
        %v683 = vld [vmem:[#allocation3 + $0x110] sm:$0xff]
        %v684 = vld [vmem:[#allocation3 + $0x118] sm:$0xff]
        %v685 = vld [vmem:[#allocation3 + $0x120] sm:$0xff]
        %v686 = vld [vmem:[#allocation3 + $0x128] sm:$0xff]
        %v687 = vld [vmem:[#allocation3 + $0x130] sm:$0xff]
        %v688 = vld [vmem:[#allocation3 + $0x138] sm:$0xff]
        %v689 = vld [vmem:[#allocation3 + $0x140] sm:$0xff]
        %v690 = vld [vmem:[#allocation3 + $0x148] sm:$0xff]
        %v691 = vld [vmem:[#allocation3 + $0x150] sm:$0xff]
        %v692 = vld [vmem:[#allocation3 + $0x158] sm:$0xff]
        %v693 = vld [vmem:[#allocation3 + $0x160] sm:$0xff]
        %v694 = vld [vmem:[#allocation3 + $0x168] sm:$0xff]
        %v695 = vld [vmem:[#allocation3 + $0x170] sm:$0xff]
        %v696 = vld [vmem:[#allocation3 + $0x178] sm:$0xff]
        %v697 = vld [vmem:[#allocation3 + $0x180] sm:$0xff]
        %v698 = vld [vmem:[#allocation3 + $0x188] sm:$0xff]
        %v699 = vld [vmem:[#allocation3 + $0x190] sm:$0xff]
        %v700 = vld [vmem:[#allocation3 + $0x198] sm:$0xff]
        %v701 = vld [vmem:[#allocation3 + $0x1a0] sm:$0xff]
        %v702 = vld [vmem:[#allocation3 + $0x1a8] sm:$0xff]
        %v703 = vld [vmem:[#allocation3 + $0x1b0] sm:$0xff]
        %v704 = vld [vmem:[#allocation3 + $0x1b8] sm:$0xff]
        %v705 = vld [vmem:[#allocation3 + $0x1c0] sm:$0xff]
        %v706 = vld [vmem:[#allocation3 + $0x1c8] sm:$0xff]
        %v707 = vld [vmem:[#allocation3 + $0x1d0] sm:$0xff]
        %v708 = vld [vmem:[#allocation3 + $0x1d8] sm:$0xff]
        %v709 = vld [vmem:[#allocation3 + $0x1e0] sm:$0xff]
        %v710 = vld [vmem:[#allocation3 + $0x1e8] sm:$0xff]
        %v711 = vld [vmem:[#allocation3 + $0x1f0] sm:$0xff]
        %v712 = vld [vmem:[#allocation3 + $0x1f8] sm:$0xff]
        %v713 = vld [vmem:[#allocation2] sm:$0xfe]
        %v714 = vld [vmem:[#allocation2 + $0x8] sm:$0xfe]
        %v715 = vld [vmem:[#allocation2 + $0x10] sm:$0xfe]
        %v716 = vld [vmem:[#allocation2 + $0x18] sm:$0xfe]
        %v717 = vld [vmem:[#allocation2 + $0x20] sm:$0x1]
        %v718 = vld [vmem:[#allocation2 + $0x28] sm:$0x1]
        %v719 = vld [vmem:[#allocation2 + $0x30] sm:$0x1]
        %v720 = vld [vmem:[#allocation2 + $0x38] sm:$0x1]
        %v721 = vpack.c.bf16 %v717, %v713
        %v722 = vpack.c.bf16 %v718, %v714
        %v723 = vpack.c.bf16 %v719, %v715
        %v724 = vpack.c.bf16 %v720, %v716
        %s725 = scalar_lea.vmem [#allocation3], 512
        %v726 = vld [vmem:[%s725] sm:$0xff]
        %v727 = vld [vmem:[%s725 + $0x8] sm:$0xff]
        %v728 = vld [vmem:[%s725 + $0x10] sm:$0xff]
        %v729 = vld [vmem:[%s725 + $0x18] sm:$0xff]
        %v730 = vld [vmem:[%s725 + $0x20] sm:$0xff]
        %v731 = vld [vmem:[%s725 + $0x28] sm:$0xff]
        %v732 = vld [vmem:[%s725 + $0x30] sm:$0xff]
        %v733 = vld [vmem:[%s725 + $0x38] sm:$0xff]
        %v734 = vld [vmem:[%s725 + $0x40] sm:$0xff]
        %v735 = vld [vmem:[%s725 + $0x48] sm:$0xff]
        %v736 = vld [vmem:[%s725 + $0x50] sm:$0xff]
        %v737 = vld [vmem:[%s725 + $0x58] sm:$0xff]
        %v738 = vld [vmem:[%s725 + $0x60] sm:$0xff]
        %v739 = vld [vmem:[%s725 + $0x68] sm:$0xff]
        %v740 = vld [vmem:[%s725 + $0x70] sm:$0xff]
        %v741 = vld [vmem:[%s725 + $0x78] sm:$0xff]
        %v742 = vld [vmem:[%s725 + $0x80] sm:$0xff]
        %v743 = vld [vmem:[%s725 + $0x88] sm:$0xff]
        %v744 = vld [vmem:[%s725 + $0x90] sm:$0xff]
        %v745 = vld [vmem:[%s725 + $0x98] sm:$0xff]
        %v746 = vld [vmem:[%s725 + $0xa0] sm:$0xff]
        %v747 = vld [vmem:[%s725 + $0xa8] sm:$0xff]
        %v748 = vld [vmem:[%s725 + $0xb0] sm:$0xff]
        %v749 = vld [vmem:[%s725 + $0xb8] sm:$0xff]
        %v750 = vld [vmem:[%s725 + $0xc0] sm:$0xff]
        %v751 = vld [vmem:[%s725 + $0xc8] sm:$0xff]
        %v752 = vld [vmem:[%s725 + $0xd0] sm:$0xff]
        %v753 = vld [vmem:[%s725 + $0xd8] sm:$0xff]
        %v754 = vld [vmem:[%s725 + $0xe0] sm:$0xff]
        %v755 = vld [vmem:[%s725 + $0xe8] sm:$0xff]
        %v756 = vld [vmem:[%s725 + $0xf0] sm:$0xff]
        %v757 = vld [vmem:[%s725 + $0xf8] sm:$0xff]
        %v758 = vld [vmem:[%s725 + $0x100] sm:$0xff]
        %v759 = vld [vmem:[%s725 + $0x108] sm:$0xff]
        %v760 = vld [vmem:[%s725 + $0x110] sm:$0xff]
        %v761 = vld [vmem:[%s725 + $0x118] sm:$0xff]
        %v762 = vld [vmem:[%s725 + $0x120] sm:$0xff]
        %v763 = vld [vmem:[%s725 + $0x128] sm:$0xff]
        %v764 = vld [vmem:[%s725 + $0x130] sm:$0xff]
        %v765 = vld [vmem:[%s725 + $0x138] sm:$0xff]
        %v766 = vld [vmem:[%s725 + $0x140] sm:$0xff]
        %v767 = vld [vmem:[%s725 + $0x148] sm:$0xff]
        %v768 = vld [vmem:[%s725 + $0x150] sm:$0xff]
        %v769 = vld [vmem:[%s725 + $0x158] sm:$0xff]
        %v770 = vld [vmem:[%s725 + $0x160] sm:$0xff]
        %v771 = vld [vmem:[%s725 + $0x168] sm:$0xff]
        %v772 = vld [vmem:[%s725 + $0x170] sm:$0xff]
        %v773 = vld [vmem:[%s725 + $0x178] sm:$0xff]
        %v774 = vld [vmem:[%s725 + $0x180] sm:$0xff]
        %v775 = vld [vmem:[%s725 + $0x188] sm:$0xff]
        %v776 = vld [vmem:[%s725 + $0x190] sm:$0xff]
        %v777 = vld [vmem:[%s725 + $0x198] sm:$0xff]
        %v778 = vld [vmem:[%s725 + $0x1a0] sm:$0xff]
        %v779 = vld [vmem:[%s725 + $0x1a8] sm:$0xff]
        %v780 = vld [vmem:[%s725 + $0x1b0] sm:$0xff]
        %v781 = vld [vmem:[%s725 + $0x1b8] sm:$0xff]
        %v782 = vld [vmem:[%s725 + $0x1c0] sm:$0xff]
        %v783 = vld [vmem:[%s725 + $0x1c8] sm:$0xff]
        %v784 = vld [vmem:[%s725 + $0x1d0] sm:$0xff]
        %v785 = vld [vmem:[%s725 + $0x1d8] sm:$0xff]
        %v786 = vld [vmem:[%s725 + $0x1e0] sm:$0xff]
        %v787 = vld [vmem:[%s725 + $0x1e8] sm:$0xff]
        %v788 = vld [vmem:[%s725 + $0x1f0] sm:$0xff]
        %v789 = vld [vmem:[%s725 + $0x1f8] sm:$0xff]
        %v791 = vshrl.u32 %v721, 16
        %v793 = vshll.u32 %v721, 16
        %v795 = vrot.slane %v793, 1
        %v796 = vor.u32 %v791, %v795
        %v798 = vshrl.u32 %v722, 16
        %v800 = vshll.u32 %v722, 16
        %v802 = vrot.slane %v800, 1
        %v803 = vor.u32 %v798, %v802
        %v805 = vshrl.u32 %v723, 16
        %v807 = vshll.u32 %v723, 16
        %v809 = vrot.slane %v807, 1
        %v810 = vor.u32 %v805, %v809
        %v812 = vshrl.u32 %v724, 16
        %v814 = vshll.u32 %v724, 16
        %v816 = vrot.slane %v814, 1
        %v817 = vor.u32 %v812, %v816
        %v886 = vunpack.c.l.b16 %v726
        %v887 = vunpack.c.h.b16 %v726
        %v888 = vunpack.c.l.b16 %v727
        %v889 = vunpack.c.h.b16 %v727
        %v890 = vunpack.c.l.b16 %v728
        %v891 = vunpack.c.h.b16 %v728
        %v892 = vunpack.c.l.b16 %v729
        %v893 = vunpack.c.h.b16 %v729
        %v894 = vunpack.c.l.b16 %v730
        %v895 = vunpack.c.h.b16 %v730
        %v896 = vunpack.c.l.b16 %v731
        %v897 = vunpack.c.h.b16 %v731
        %v898 = vunpack.c.l.b16 %v732
        %v899 = vunpack.c.h.b16 %v732
        %v900 = vunpack.c.l.b16 %v733
        %v901 = vunpack.c.h.b16 %v733
        %v902 = vunpack.c.l.b16 %v734
        %v903 = vunpack.c.h.b16 %v734
        %v904 = vunpack.c.l.b16 %v735
        %v905 = vunpack.c.h.b16 %v735
        %v906 = vunpack.c.l.b16 %v736
        %v907 = vunpack.c.h.b16 %v736
        %v908 = vunpack.c.l.b16 %v737
        %v909 = vunpack.c.h.b16 %v737
        %v910 = vunpack.c.l.b16 %v738
        %v911 = vunpack.c.h.b16 %v738
        %v912 = vunpack.c.l.b16 %v739
        %v913 = vunpack.c.h.b16 %v739
        %v914 = vunpack.c.l.b16 %v740
        %v915 = vunpack.c.h.b16 %v740
        %v916 = vunpack.c.l.b16 %v741
        %v917 = vunpack.c.h.b16 %v741
        %v918 = vunpack.c.l.b16 %v742
        %v919 = vunpack.c.h.b16 %v742
        %v920 = vunpack.c.l.b16 %v743
        %v921 = vunpack.c.h.b16 %v743
        %v922 = vunpack.c.l.b16 %v744
        %v923 = vunpack.c.h.b16 %v744
        %v924 = vunpack.c.l.b16 %v745
        %v925 = vunpack.c.h.b16 %v745
        %v926 = vunpack.c.l.b16 %v746
        %v927 = vunpack.c.h.b16 %v746
        %v928 = vunpack.c.l.b16 %v747
        %v929 = vunpack.c.h.b16 %v747
        %v930 = vunpack.c.l.b16 %v748
        %v931 = vunpack.c.h.b16 %v748
        %v932 = vunpack.c.l.b16 %v749
        %v933 = vunpack.c.h.b16 %v749
        %v934 = vunpack.c.l.b16 %v750
        %v935 = vunpack.c.h.b16 %v750
        %v936 = vunpack.c.l.b16 %v751
        %v937 = vunpack.c.h.b16 %v751
        %v938 = vunpack.c.l.b16 %v752
        %v939 = vunpack.c.h.b16 %v752
        %v940 = vunpack.c.l.b16 %v753
        %v941 = vunpack.c.h.b16 %v753
        %v942 = vunpack.c.l.b16 %v754
        %v943 = vunpack.c.h.b16 %v754
        %v944 = vunpack.c.l.b16 %v755
        %v945 = vunpack.c.h.b16 %v755
        %v946 = vunpack.c.l.b16 %v756
        %v947 = vunpack.c.h.b16 %v756
        %v948 = vunpack.c.l.b16 %v757
        %v949 = vunpack.c.h.b16 %v757
        %v950 = vunpack.c.l.b16 %v758
        %v951 = vunpack.c.h.b16 %v758
        %v952 = vunpack.c.l.b16 %v759
        %v953 = vunpack.c.h.b16 %v759
        %v954 = vunpack.c.l.b16 %v760
        %v955 = vunpack.c.h.b16 %v760
        %v956 = vunpack.c.l.b16 %v761
        %v957 = vunpack.c.h.b16 %v761
        %v958 = vunpack.c.l.b16 %v762
        %v959 = vunpack.c.h.b16 %v762
        %v960 = vunpack.c.l.b16 %v763
        %v961 = vunpack.c.h.b16 %v763
        %v962 = vunpack.c.l.b16 %v764
        %v963 = vunpack.c.h.b16 %v764
        %v964 = vunpack.c.l.b16 %v765
        %v965 = vunpack.c.h.b16 %v765
        %v966 = vunpack.c.l.b16 %v766
        %v967 = vunpack.c.h.b16 %v766
        %v968 = vunpack.c.l.b16 %v767
        %v969 = vunpack.c.h.b16 %v767
        %v970 = vunpack.c.l.b16 %v768
        %v971 = vunpack.c.h.b16 %v768
        %v972 = vunpack.c.l.b16 %v769
        %v973 = vunpack.c.h.b16 %v769
        %v974 = vunpack.c.l.b16 %v770
        %v975 = vunpack.c.h.b16 %v770
        %v976 = vunpack.c.l.b16 %v771
        %v977 = vunpack.c.h.b16 %v771
        %v978 = vunpack.c.l.b16 %v772
        %v979 = vunpack.c.h.b16 %v772
        %v980 = vunpack.c.l.b16 %v773
        %v981 = vunpack.c.h.b16 %v773
        %v982 = vunpack.c.l.b16 %v774
        %v983 = vunpack.c.h.b16 %v774
        %v984 = vunpack.c.l.b16 %v775
        %v985 = vunpack.c.h.b16 %v775
        %v986 = vunpack.c.l.b16 %v776
        %v987 = vunpack.c.h.b16 %v776
        %v988 = vunpack.c.l.b16 %v777
        %v989 = vunpack.c.h.b16 %v777
        %v990 = vunpack.c.l.b16 %v778
        %v991 = vunpack.c.h.b16 %v778
        %v992 = vunpack.c.l.b16 %v779
        %v993 = vunpack.c.h.b16 %v779
        %v994 = vunpack.c.l.b16 %v780
        %v995 = vunpack.c.h.b16 %v780
        %v996 = vunpack.c.l.b16 %v781
        %v997 = vunpack.c.h.b16 %v781
        %v998 = vunpack.c.l.b16 %v782
        %v999 = vunpack.c.h.b16 %v782
        %v1000 = vunpack.c.l.b16 %v783
        %v1001 = vunpack.c.h.b16 %v783
        %v1002 = vunpack.c.l.b16 %v784
        %v1003 = vunpack.c.h.b16 %v784
        %v1004 = vunpack.c.l.b16 %v785
        %v1005 = vunpack.c.h.b16 %v785
        %v1006 = vunpack.c.l.b16 %v786
        %v1007 = vunpack.c.h.b16 %v786
        %v1008 = vunpack.c.l.b16 %v787
        %v1009 = vunpack.c.h.b16 %v787
        %v1010 = vunpack.c.l.b16 %v788
        %v1011 = vunpack.c.h.b16 %v788
        %v1012 = vunpack.c.l.b16 %v789
        %v1013 = vunpack.c.h.b16 %v789
        %v1014 = vpack.c.b16 %v888, %v886
        %v1015 = vpack.c.b16 %v889, %v887
        %v1016 = vpack.c.b16 %v892, %v890
        %v1017 = vpack.c.b16 %v893, %v891
        %v1018 = vpack.c.b16 %v896, %v894
        %v1019 = vpack.c.b16 %v897, %v895
        %v1020 = vpack.c.b16 %v900, %v898
        %v1021 = vpack.c.b16 %v901, %v899
        %v1022 = vpack.c.b16 %v904, %v902
        %v1023 = vpack.c.b16 %v905, %v903
        %v1024 = vpack.c.b16 %v908, %v906
        %v1025 = vpack.c.b16 %v909, %v907
        %v1026 = vpack.c.b16 %v912, %v910
        %v1027 = vpack.c.b16 %v913, %v911
        %v1028 = vpack.c.b16 %v916, %v914
        %v1029 = vpack.c.b16 %v917, %v915
        %v1030 = vpack.c.b16 %v920, %v918
        %v1031 = vpack.c.b16 %v921, %v919
        %v1032 = vpack.c.b16 %v924, %v922
        %v1033 = vpack.c.b16 %v925, %v923
        %v1034 = vpack.c.b16 %v928, %v926
        %v1035 = vpack.c.b16 %v929, %v927
        %v1036 = vpack.c.b16 %v932, %v930
        %v1037 = vpack.c.b16 %v933, %v931
        %v1038 = vpack.c.b16 %v936, %v934
        %v1039 = vpack.c.b16 %v937, %v935
        %v1040 = vpack.c.b16 %v940, %v938
        %v1041 = vpack.c.b16 %v941, %v939
        %v1042 = vpack.c.b16 %v944, %v942
        %v1043 = vpack.c.b16 %v945, %v943
        %v1044 = vpack.c.b16 %v948, %v946
        %v1045 = vpack.c.b16 %v949, %v947
        %v1046 = vpack.c.b16 %v952, %v950
        %v1047 = vpack.c.b16 %v953, %v951
        %v1048 = vpack.c.b16 %v956, %v954
        %v1049 = vpack.c.b16 %v957, %v955
        %v1050 = vpack.c.b16 %v960, %v958
        %v1051 = vpack.c.b16 %v961, %v959
        %v1052 = vpack.c.b16 %v964, %v962
        %v1053 = vpack.c.b16 %v965, %v963
        %v1054 = vpack.c.b16 %v968, %v966
        %v1055 = vpack.c.b16 %v969, %v967
        %v1056 = vpack.c.b16 %v972, %v970
        %v1057 = vpack.c.b16 %v973, %v971
        %v1058 = vpack.c.b16 %v976, %v974
        %v1059 = vpack.c.b16 %v977, %v975
        %v1060 = vpack.c.b16 %v980, %v978
        %v1061 = vpack.c.b16 %v981, %v979
        %v1062 = vpack.c.b16 %v984, %v982
        %v1063 = vpack.c.b16 %v985, %v983
        %v1064 = vpack.c.b16 %v988, %v986
        %v1065 = vpack.c.b16 %v989, %v987
        %v1066 = vpack.c.b16 %v992, %v990
        %v1067 = vpack.c.b16 %v993, %v991
        %v1068 = vpack.c.b16 %v996, %v994
        %v1069 = vpack.c.b16 %v997, %v995
        %v1070 = vpack.c.b16 %v1000, %v998
        %v1071 = vpack.c.b16 %v1001, %v999
        %v1072 = vpack.c.b16 %v1004, %v1002
        %v1073 = vpack.c.b16 %v1005, %v1003
        %v1074 = vpack.c.b16 %v1008, %v1006
        %v1075 = vpack.c.b16 %v1009, %v1007
        %v1076 = vpack.c.b16 %v1012, %v1010
        %v1077 = vpack.c.b16 %v1013, %v1011
        %1142 = vmatprep.subr.bf16.mxu0 %v1015
        %1143 = vmatpush1.bf16.msra.mxu0 %v1014
        %1144 = vmatprep.subr.bf16.mxu0 %v1017
        %1145 = vmatpush1.bf16.msra.mxu0 %v1016
        %1146 = vmatprep.subr.bf16.mxu0 %v1019
        %1147 = vmatpush1.bf16.msra.mxu0 %v1018
        %1148 = vmatprep.subr.bf16.mxu0 %v1021
        %1149 = vmatpush1.bf16.msra.mxu0 %v1020
        %1150 = vmatprep.subr.bf16.mxu0 %v1023
        %1151 = vmatpush1.bf16.msra.mxu0 %v1022
        %1152 = vmatprep.subr.bf16.mxu0 %v1025
        %1153 = vmatpush1.bf16.msra.mxu0 %v1024
        %1154 = vmatprep.subr.bf16.mxu0 %v1027
        %1155 = vmatpush1.bf16.msra.mxu0 %v1026
        %1156 = vmatprep.subr.bf16.mxu0 %v1029
        %1157 = vmatpush1.bf16.msra.mxu0 %v1028
        %1158 = vmatprep.subr.bf16.mxu0 %v1031
        %1159 = vmatpush1.bf16.msra.mxu0 %v1030
        %1160 = vmatprep.subr.bf16.mxu0 %v1033
        %1161 = vmatpush1.bf16.msra.mxu0 %v1032
        %1162 = vmatprep.subr.bf16.mxu0 %v1035
        %1163 = vmatpush1.bf16.msra.mxu0 %v1034
        %1164 = vmatprep.subr.bf16.mxu0 %v1037
        %1165 = vmatpush1.bf16.msra.mxu0 %v1036
        %1166 = vmatprep.subr.bf16.mxu0 %v1039
        %1167 = vmatpush1.bf16.msra.mxu0 %v1038
        %1168 = vmatprep.subr.bf16.mxu0 %v1041
        %1169 = vmatpush1.bf16.msra.mxu0 %v1040
        %1170 = vmatprep.subr.bf16.mxu0 %v1043
        %1171 = vmatpush1.bf16.msra.mxu0 %v1042
        %1172 = vmatprep.subr.bf16.mxu0 %v1045
        %1173 = vmatpush1.bf16.msra.mxu0 %v1044
        %1174 = vmatprep.mubr.bf16.mxu0 %v803
        %1175 = vmatmul.mubr.bf16.gmra.mrb[0].mxu0 %v796
        %v1176 = vpop.f32.mrb[0].mxu0
        %v1177 = vadd.f32 0.0, %v1176
        %v1178 = vpop.f32.mrb[0].mxu0
        %v1179 = vadd.f32 0.0, %v1178
        %v1180 = vpop.f32.mrb[0].mxu0
        %v1181 = vpop.f32.mrb[0].mxu0
        %1182 = vdwg.mxu0
        %1183 = vmatprep.subr.bf16.mxu0 %v1047
        %1184 = vmatpush1.bf16.msra.mxu0 %v1046
        %1185 = vmatprep.subr.bf16.mxu0 %v1049
        %1186 = vmatpush1.bf16.msra.mxu0 %v1048
        %1187 = vmatprep.subr.bf16.mxu0 %v1051
        %1188 = vmatpush1.bf16.msra.mxu0 %v1050
        %1189 = vmatprep.subr.bf16.mxu0 %v1053
        %1190 = vmatpush1.bf16.msra.mxu0 %v1052
        %1191 = vmatprep.subr.bf16.mxu0 %v1055
        %1192 = vmatpush1.bf16.msra.mxu0 %v1054
        %1193 = vmatprep.subr.bf16.mxu0 %v1057
        %1194 = vmatpush1.bf16.msra.mxu0 %v1056
        %1195 = vmatprep.subr.bf16.mxu0 %v1059
        %1196 = vmatpush1.bf16.msra.mxu0 %v1058
        %1197 = vmatprep.subr.bf16.mxu0 %v1061
        %1198 = vmatpush1.bf16.msra.mxu0 %v1060
        %1199 = vmatprep.subr.bf16.mxu0 %v1063
        %1200 = vmatpush1.bf16.msra.mxu0 %v1062
        %1201 = vmatprep.subr.bf16.mxu0 %v1065
        %1202 = vmatpush1.bf16.msra.mxu0 %v1064
        %1203 = vmatprep.subr.bf16.mxu0 %v1067
        %1204 = vmatpush1.bf16.msra.mxu0 %v1066
        %1205 = vmatprep.subr.bf16.mxu0 %v1069
        %1206 = vmatpush1.bf16.msra.mxu0 %v1068
        %1207 = vmatprep.subr.bf16.mxu0 %v1071
        %1208 = vmatpush1.bf16.msra.mxu0 %v1070
        %1209 = vmatprep.subr.bf16.mxu0 %v1073
        %1210 = vmatpush1.bf16.msra.mxu0 %v1072
        %1211 = vmatprep.subr.bf16.mxu0 %v1075
        %1212 = vmatpush1.bf16.msra.mxu0 %v1074
        %1213 = vmatprep.subr.bf16.mxu0 %v1077
        %1214 = vmatpush1.bf16.msra.mxu0 %v1076
        %1215 = vmatprep.mubr.bf16.mxu0 %v817
        %1216 = vmatmul.mubr.bf16.gmra.mrb[0].mxu0 %v810
        %v1217 = vpop.f32.mrb[0].mxu0
        %v1218 = vadd.f32 %v1177, %v1217
        %v1219 = vpop.f32.mrb[0].mxu0
        %v1220 = vadd.f32 %v1179, %v1219
        %v1221 = vpop.f32.mrb[0].mxu0
        %v1222 = vpop.f32.mrb[0].mxu0
        %1223 = vdwg.mxu0
        %v1288 = vunpack.c.l.b16 %v649
        %v1289 = vunpack.c.h.b16 %v649
        %v1290 = vunpack.c.l.b16 %v650
        %v1291 = vunpack.c.h.b16 %v650
        %v1292 = vunpack.c.l.b16 %v651
        %v1293 = vunpack.c.h.b16 %v651
        %v1294 = vunpack.c.l.b16 %v652
        %v1295 = vunpack.c.h.b16 %v652
        %v1296 = vunpack.c.l.b16 %v653
        %v1297 = vunpack.c.h.b16 %v653
        %v1298 = vunpack.c.l.b16 %v654
        %v1299 = vunpack.c.h.b16 %v654
        %v1300 = vunpack.c.l.b16 %v655
        %v1301 = vunpack.c.h.b16 %v655
        %v1302 = vunpack.c.l.b16 %v656
        %v1303 = vunpack.c.h.b16 %v656
        %v1304 = vunpack.c.l.b16 %v657
        %v1305 = vunpack.c.h.b16 %v657
        %v1306 = vunpack.c.l.b16 %v658
        %v1307 = vunpack.c.h.b16 %v658
        %v1308 = vunpack.c.l.b16 %v659
        %v1309 = vunpack.c.h.b16 %v659
        %v1310 = vunpack.c.l.b16 %v660
        %v1311 = vunpack.c.h.b16 %v660
        %v1312 = vunpack.c.l.b16 %v661
        %v1313 = vunpack.c.h.b16 %v661
        %v1314 = vunpack.c.l.b16 %v662
        %v1315 = vunpack.c.h.b16 %v662
        %v1316 = vunpack.c.l.b16 %v663
        %v1317 = vunpack.c.h.b16 %v663
        %v1318 = vunpack.c.l.b16 %v664
        %v1319 = vunpack.c.h.b16 %v664
        %v1320 = vunpack.c.l.b16 %v665
        %v1321 = vunpack.c.h.b16 %v665
        %v1322 = vunpack.c.l.b16 %v666
        %v1323 = vunpack.c.h.b16 %v666
        %v1324 = vunpack.c.l.b16 %v667
        %v1325 = vunpack.c.h.b16 %v667
        %v1326 = vunpack.c.l.b16 %v668
        %v1327 = vunpack.c.h.b16 %v668
        %v1328 = vunpack.c.l.b16 %v669
        %v1329 = vunpack.c.h.b16 %v669
        %v1330 = vunpack.c.l.b16 %v670
        %v1331 = vunpack.c.h.b16 %v670
        %v1332 = vunpack.c.l.b16 %v671
        %v1333 = vunpack.c.h.b16 %v671
        %v1334 = vunpack.c.l.b16 %v672
        %v1335 = vunpack.c.h.b16 %v672
        %v1336 = vunpack.c.l.b16 %v673
        %v1337 = vunpack.c.h.b16 %v673
        %v1338 = vunpack.c.l.b16 %v674
        %v1339 = vunpack.c.h.b16 %v674
        %v1340 = vunpack.c.l.b16 %v675
        %v1341 = vunpack.c.h.b16 %v675
        %v1342 = vunpack.c.l.b16 %v676
        %v1343 = vunpack.c.h.b16 %v676
        %v1344 = vunpack.c.l.b16 %v677
        %v1345 = vunpack.c.h.b16 %v677
        %v1346 = vunpack.c.l.b16 %v678
        %v1347 = vunpack.c.h.b16 %v678
        %v1348 = vunpack.c.l.b16 %v679
        %v1349 = vunpack.c.h.b16 %v679
        %v1350 = vunpack.c.l.b16 %v680
        %v1351 = vunpack.c.h.b16 %v680
        %v1352 = vunpack.c.l.b16 %v681
        %v1353 = vunpack.c.h.b16 %v681
        %v1354 = vunpack.c.l.b16 %v682
        %v1355 = vunpack.c.h.b16 %v682
        %v1356 = vunpack.c.l.b16 %v683
        %v1357 = vunpack.c.h.b16 %v683
        %v1358 = vunpack.c.l.b16 %v684
        %v1359 = vunpack.c.h.b16 %v684
        %v1360 = vunpack.c.l.b16 %v685
        %v1361 = vunpack.c.h.b16 %v685
        %v1362 = vunpack.c.l.b16 %v686
        %v1363 = vunpack.c.h.b16 %v686
        %v1364 = vunpack.c.l.b16 %v687
        %v1365 = vunpack.c.h.b16 %v687
        %v1366 = vunpack.c.l.b16 %v688
        %v1367 = vunpack.c.h.b16 %v688
        %v1368 = vunpack.c.l.b16 %v689
        %v1369 = vunpack.c.h.b16 %v689
        %v1370 = vunpack.c.l.b16 %v690
        %v1371 = vunpack.c.h.b16 %v690
        %v1372 = vunpack.c.l.b16 %v691
        %v1373 = vunpack.c.h.b16 %v691
        %v1374 = vunpack.c.l.b16 %v692
        %v1375 = vunpack.c.h.b16 %v692
        %v1376 = vunpack.c.l.b16 %v693
        %v1377 = vunpack.c.h.b16 %v693
        %v1378 = vunpack.c.l.b16 %v694
        %v1379 = vunpack.c.h.b16 %v694
        %v1380 = vunpack.c.l.b16 %v695
        %v1381 = vunpack.c.h.b16 %v695
        %v1382 = vunpack.c.l.b16 %v696
        %v1383 = vunpack.c.h.b16 %v696
        %v1384 = vunpack.c.l.b16 %v697
        %v1385 = vunpack.c.h.b16 %v697
        %v1386 = vunpack.c.l.b16 %v698
        %v1387 = vunpack.c.h.b16 %v698
        %v1388 = vunpack.c.l.b16 %v699
        %v1389 = vunpack.c.h.b16 %v699
        %v1390 = vunpack.c.l.b16 %v700
        %v1391 = vunpack.c.h.b16 %v700
        %v1392 = vunpack.c.l.b16 %v701
        %v1393 = vunpack.c.h.b16 %v701
        %v1394 = vunpack.c.l.b16 %v702
        %v1395 = vunpack.c.h.b16 %v702
        %v1396 = vunpack.c.l.b16 %v703
        %v1397 = vunpack.c.h.b16 %v703
        %v1398 = vunpack.c.l.b16 %v704
        %v1399 = vunpack.c.h.b16 %v704
        %v1400 = vunpack.c.l.b16 %v705
        %v1401 = vunpack.c.h.b16 %v705
        %v1402 = vunpack.c.l.b16 %v706
        %v1403 = vunpack.c.h.b16 %v706
        %v1404 = vunpack.c.l.b16 %v707
        %v1405 = vunpack.c.h.b16 %v707
        %v1406 = vunpack.c.l.b16 %v708
        %v1407 = vunpack.c.h.b16 %v708
        %v1408 = vunpack.c.l.b16 %v709
        %v1409 = vunpack.c.h.b16 %v709
        %v1410 = vunpack.c.l.b16 %v710
        %v1411 = vunpack.c.h.b16 %v710
        %v1412 = vunpack.c.l.b16 %v711
        %v1413 = vunpack.c.h.b16 %v711
        %v1414 = vunpack.c.l.b16 %v712
        %v1415 = vunpack.c.h.b16 %v712
        %v1416 = vpack.c.b16 %v1290, %v1288
        %v1417 = vpack.c.b16 %v1291, %v1289
        %v1418 = vpack.c.b16 %v1294, %v1292
        %v1419 = vpack.c.b16 %v1295, %v1293
        %v1420 = vpack.c.b16 %v1298, %v1296
        %v1421 = vpack.c.b16 %v1299, %v1297
        %v1422 = vpack.c.b16 %v1302, %v1300
        %v1423 = vpack.c.b16 %v1303, %v1301
        %v1424 = vpack.c.b16 %v1306, %v1304
        %v1425 = vpack.c.b16 %v1307, %v1305
        %v1426 = vpack.c.b16 %v1310, %v1308
        %v1427 = vpack.c.b16 %v1311, %v1309
        %v1428 = vpack.c.b16 %v1314, %v1312
        %v1429 = vpack.c.b16 %v1315, %v1313
        %v1430 = vpack.c.b16 %v1318, %v1316
        %v1431 = vpack.c.b16 %v1319, %v1317
        %v1432 = vpack.c.b16 %v1322, %v1320
        %v1433 = vpack.c.b16 %v1323, %v1321
        %v1434 = vpack.c.b16 %v1326, %v1324
        %v1435 = vpack.c.b16 %v1327, %v1325
        %v1436 = vpack.c.b16 %v1330, %v1328
        %v1437 = vpack.c.b16 %v1331, %v1329
        %v1438 = vpack.c.b16 %v1334, %v1332
        %v1439 = vpack.c.b16 %v1335, %v1333
        %v1440 = vpack.c.b16 %v1338, %v1336
        %v1441 = vpack.c.b16 %v1339, %v1337
        %v1442 = vpack.c.b16 %v1342, %v1340
        %v1443 = vpack.c.b16 %v1343, %v1341
        %v1444 = vpack.c.b16 %v1346, %v1344
        %v1445 = vpack.c.b16 %v1347, %v1345
        %v1446 = vpack.c.b16 %v1350, %v1348
        %v1447 = vpack.c.b16 %v1351, %v1349
        %v1448 = vpack.c.b16 %v1354, %v1352
        %v1449 = vpack.c.b16 %v1355, %v1353
        %v1450 = vpack.c.b16 %v1358, %v1356
        %v1451 = vpack.c.b16 %v1359, %v1357
        %v1452 = vpack.c.b16 %v1362, %v1360
        %v1453 = vpack.c.b16 %v1363, %v1361
        %v1454 = vpack.c.b16 %v1366, %v1364
        %v1455 = vpack.c.b16 %v1367, %v1365
        %v1456 = vpack.c.b16 %v1370, %v1368
        %v1457 = vpack.c.b16 %v1371, %v1369
        %v1458 = vpack.c.b16 %v1374, %v1372
        %v1459 = vpack.c.b16 %v1375, %v1373
        %v1460 = vpack.c.b16 %v1378, %v1376
        %v1461 = vpack.c.b16 %v1379, %v1377
        %v1462 = vpack.c.b16 %v1382, %v1380
        %v1463 = vpack.c.b16 %v1383, %v1381
        %v1464 = vpack.c.b16 %v1386, %v1384
        %v1465 = vpack.c.b16 %v1387, %v1385
        %v1466 = vpack.c.b16 %v1390, %v1388
        %v1467 = vpack.c.b16 %v1391, %v1389
        %v1468 = vpack.c.b16 %v1394, %v1392
        %v1469 = vpack.c.b16 %v1395, %v1393
        %v1470 = vpack.c.b16 %v1398, %v1396
        %v1471 = vpack.c.b16 %v1399, %v1397
        %v1472 = vpack.c.b16 %v1402, %v1400
        %v1473 = vpack.c.b16 %v1403, %v1401
        %v1474 = vpack.c.b16 %v1406, %v1404
        %v1475 = vpack.c.b16 %v1407, %v1405
        %v1476 = vpack.c.b16 %v1410, %v1408
        %v1477 = vpack.c.b16 %v1411, %v1409
        %v1478 = vpack.c.b16 %v1414, %v1412
        %v1479 = vpack.c.b16 %v1415, %v1413
        %1544 = vmatprep.subr.bf16.mxu0 %v1417
        %1545 = vmatpush1.bf16.msra.mxu0 %v1416
        %1546 = vmatprep.subr.bf16.mxu0 %v1419
        %1547 = vmatpush1.bf16.msra.mxu0 %v1418
        %1548 = vmatprep.subr.bf16.mxu0 %v1421
        %1549 = vmatpush1.bf16.msra.mxu0 %v1420
        %1550 = vmatprep.subr.bf16.mxu0 %v1423
        %1551 = vmatpush1.bf16.msra.mxu0 %v1422
        %1552 = vmatprep.subr.bf16.mxu0 %v1425
        %1553 = vmatpush1.bf16.msra.mxu0 %v1424
        %1554 = vmatprep.subr.bf16.mxu0 %v1427
        %1555 = vmatpush1.bf16.msra.mxu0 %v1426
        %1556 = vmatprep.subr.bf16.mxu0 %v1429
        %1557 = vmatpush1.bf16.msra.mxu0 %v1428
        %1558 = vmatprep.subr.bf16.mxu0 %v1431
        %1559 = vmatpush1.bf16.msra.mxu0 %v1430
        %1560 = vmatprep.subr.bf16.mxu0 %v1433
        %1561 = vmatpush1.bf16.msra.mxu0 %v1432
        %1562 = vmatprep.subr.bf16.mxu0 %v1435
        %1563 = vmatpush1.bf16.msra.mxu0 %v1434
        %1564 = vmatprep.subr.bf16.mxu0 %v1437
        %1565 = vmatpush1.bf16.msra.mxu0 %v1436
        %1566 = vmatprep.subr.bf16.mxu0 %v1439
        %1567 = vmatpush1.bf16.msra.mxu0 %v1438
        %1568 = vmatprep.subr.bf16.mxu0 %v1441
        %1569 = vmatpush1.bf16.msra.mxu0 %v1440
        %1570 = vmatprep.subr.bf16.mxu0 %v1443
        %1571 = vmatpush1.bf16.msra.mxu0 %v1442
        %1572 = vmatprep.subr.bf16.mxu0 %v1445
        %1573 = vmatpush1.bf16.msra.mxu0 %v1444
        %1574 = vmatprep.subr.bf16.mxu0 %v1447
        %1575 = vmatpush1.bf16.msra.mxu0 %v1446
        %1576 = vmatprep.mubr.bf16.mxu0 %v646
        %1577 = vmatmul.mubr.bf16.gmra.mrb[0].mxu0 %v645
        %v1578 = vpop.f32.mrb[0].mxu0
        %v1579 = vadd.f32 %v1218, %v1578
        %v1580 = vpop.f32.mrb[0].mxu0
        %v1581 = vadd.f32 %v1220, %v1580
        %v1582 = vpop.f32.mrb[0].mxu0
        %v1583 = vpop.f32.mrb[0].mxu0
        %1584 = vdwg.mxu0
        %1585 = vmatprep.subr.bf16.mxu0 %v1449
        %1586 = vmatpush1.bf16.msra.mxu0 %v1448
        %1587 = vmatprep.subr.bf16.mxu0 %v1451
        %1588 = vmatpush1.bf16.msra.mxu0 %v1450
        %1589 = vmatprep.subr.bf16.mxu0 %v1453
        %1590 = vmatpush1.bf16.msra.mxu0 %v1452
        %1591 = vmatprep.subr.bf16.mxu0 %v1455
        %1592 = vmatpush1.bf16.msra.mxu0 %v1454
        %1593 = vmatprep.subr.bf16.mxu0 %v1457
        %1594 = vmatpush1.bf16.msra.mxu0 %v1456
        %1595 = vmatprep.subr.bf16.mxu0 %v1459
        %1596 = vmatpush1.bf16.msra.mxu0 %v1458
        %1597 = vmatprep.subr.bf16.mxu0 %v1461
        %1598 = vmatpush1.bf16.msra.mxu0 %v1460
        %1599 = vmatprep.subr.bf16.mxu0 %v1463
        %1600 = vmatpush1.bf16.msra.mxu0 %v1462
        %1601 = vmatprep.subr.bf16.mxu0 %v1465
        %1602 = vmatpush1.bf16.msra.mxu0 %v1464
        %1603 = vmatprep.subr.bf16.mxu0 %v1467
        %1604 = vmatpush1.bf16.msra.mxu0 %v1466
        %1605 = vmatprep.subr.bf16.mxu0 %v1469
        %1606 = vmatpush1.bf16.msra.mxu0 %v1468
        %1607 = vmatprep.subr.bf16.mxu0 %v1471
        %1608 = vmatpush1.bf16.msra.mxu0 %v1470
        %1609 = vmatprep.subr.bf16.mxu0 %v1473
        %1610 = vmatpush1.bf16.msra.mxu0 %v1472
        %1611 = vmatprep.subr.bf16.mxu0 %v1475
        %1612 = vmatpush1.bf16.msra.mxu0 %v1474
        %1613 = vmatprep.subr.bf16.mxu0 %v1477
        %1614 = vmatpush1.bf16.msra.mxu0 %v1476
        %1615 = vmatprep.subr.bf16.mxu0 %v1479
        %1616 = vmatpush1.bf16.msra.mxu0 %v1478
        %1617 = vmatprep.mubr.bf16.mxu0 %v648
        %1618 = vmatmul.mubr.bf16.gmra.mrb[0].mxu0 %v647
        %v1619 = vpop.f32.mrb[0].mxu0
        %v1620 = vadd.f32 %v1579, %v1619
        %v1621 = vpop.f32.mrb[0].mxu0
        %v1622 = vadd.f32 %v1581, %v1621
        %v1623 = vpop.f32.mrb[0].mxu0
        %v1624 = vpop.f32.mrb[0].mxu0
        %1625 = vdwg.mxu0
        %v1626 = vld [vmem:[#allocation2] sm:$0xfc]
        %v1627 = vld [vmem:[#allocation2 + $0x8] sm:$0xfc]
        %v1628 = vld [vmem:[#allocation2 + $0x10] sm:$0xfc]
        %v1629 = vld [vmem:[#allocation2 + $0x18] sm:$0xfc]
        %v1630 = vld [vmem:[#allocation2 + $0x20] sm:$0x3]
        %v1631 = vld [vmem:[#allocation2 + $0x28] sm:$0x3]
        %v1632 = vld [vmem:[#allocation2 + $0x30] sm:$0x3]
        %v1633 = vld [vmem:[#allocation2 + $0x38] sm:$0x3]
        %v1634 = vpack.c.bf16 %v1630, %v1626
        %v1635 = vpack.c.bf16 %v1631, %v1627
        %v1636 = vpack.c.bf16 %v1632, %v1628
        %v1637 = vpack.c.bf16 %v1633, %v1629
        %s1638 = scalar_lea.vmem [#allocation3], 1024
        %v1639 = vld [vmem:[%s1638] sm:$0xff]
        %v1640 = vld [vmem:[%s1638 + $0x8] sm:$0xff]
        %v1641 = vld [vmem:[%s1638 + $0x10] sm:$0xff]
        %v1642 = vld [vmem:[%s1638 + $0x18] sm:$0xff]
        %v1643 = vld [vmem:[%s1638 + $0x20] sm:$0xff]
        %v1644 = vld [vmem:[%s1638 + $0x28] sm:$0xff]
        %v1645 = vld [vmem:[%s1638 + $0x30] sm:$0xff]
        %v1646 = vld [vmem:[%s1638 + $0x38] sm:$0xff]
        %v1647 = vld [vmem:[%s1638 + $0x40] sm:$0xff]
        %v1648 = vld [vmem:[%s1638 + $0x48] sm:$0xff]
        %v1649 = vld [vmem:[%s1638 + $0x50] sm:$0xff]
        %v1650 = vld [vmem:[%s1638 + $0x58] sm:$0xff]
        %v1651 = vld [vmem:[%s1638 + $0x60] sm:$0xff]
        %v1652 = vld [vmem:[%s1638 + $0x68] sm:$0xff]
        %v1653 = vld [vmem:[%s1638 + $0x70] sm:$0xff]
        %v1654 = vld [vmem:[%s1638 + $0x78] sm:$0xff]
        %v1655 = vld [vmem:[%s1638 + $0x80] sm:$0xff]
        %v1656 = vld [vmem:[%s1638 + $0x88] sm:$0xff]
        %v1657 = vld [vmem:[%s1638 + $0x90] sm:$0xff]
        %v1658 = vld [vmem:[%s1638 + $0x98] sm:$0xff]
        %v1659 = vld [vmem:[%s1638 + $0xa0] sm:$0xff]
        %v1660 = vld [vmem:[%s1638 + $0xa8] sm:$0xff]
        %v1661 = vld [vmem:[%s1638 + $0xb0] sm:$0xff]
        %v1662 = vld [vmem:[%s1638 + $0xb8] sm:$0xff]
        %v1663 = vld [vmem:[%s1638 + $0xc0] sm:$0xff]
        %v1664 = vld [vmem:[%s1638 + $0xc8] sm:$0xff]
        %v1665 = vld [vmem:[%s1638 + $0xd0] sm:$0xff]
        %v1666 = vld [vmem:[%s1638 + $0xd8] sm:$0xff]
        %v1667 = vld [vmem:[%s1638 + $0xe0] sm:$0xff]
        %v1668 = vld [vmem:[%s1638 + $0xe8] sm:$0xff]
        %v1669 = vld [vmem:[%s1638 + $0xf0] sm:$0xff]
        %v1670 = vld [vmem:[%s1638 + $0xf8] sm:$0xff]
        %v1671 = vld [vmem:[%s1638 + $0x100] sm:$0xff]
        %v1672 = vld [vmem:[%s1638 + $0x108] sm:$0xff]
        %v1673 = vld [vmem:[%s1638 + $0x110] sm:$0xff]
        %v1674 = vld [vmem:[%s1638 + $0x118] sm:$0xff]
        %v1675 = vld [vmem:[%s1638 + $0x120] sm:$0xff]
        %v1676 = vld [vmem:[%s1638 + $0x128] sm:$0xff]
        %v1677 = vld [vmem:[%s1638 + $0x130] sm:$0xff]
        %v1678 = vld [vmem:[%s1638 + $0x138] sm:$0xff]
        %v1679 = vld [vmem:[%s1638 + $0x140] sm:$0xff]
        %v1680 = vld [vmem:[%s1638 + $0x148] sm:$0xff]
        %v1681 = vld [vmem:[%s1638 + $0x150] sm:$0xff]
        %v1682 = vld [vmem:[%s1638 + $0x158] sm:$0xff]
        %v1683 = vld [vmem:[%s1638 + $0x160] sm:$0xff]
        %v1684 = vld [vmem:[%s1638 + $0x168] sm:$0xff]
        %v1685 = vld [vmem:[%s1638 + $0x170] sm:$0xff]
        %v1686 = vld [vmem:[%s1638 + $0x178] sm:$0xff]
        %v1687 = vld [vmem:[%s1638 + $0x180] sm:$0xff]
        %v1688 = vld [vmem:[%s1638 + $0x188] sm:$0xff]
        %v1689 = vld [vmem:[%s1638 + $0x190] sm:$0xff]
        %v1690 = vld [vmem:[%s1638 + $0x198] sm:$0xff]
        %v1691 = vld [vmem:[%s1638 + $0x1a0] sm:$0xff]
        %v1692 = vld [vmem:[%s1638 + $0x1a8] sm:$0xff]
        %v1693 = vld [vmem:[%s1638 + $0x1b0] sm:$0xff]
        %v1694 = vld [vmem:[%s1638 + $0x1b8] sm:$0xff]
        %v1695 = vld [vmem:[%s1638 + $0x1c0] sm:$0xff]
        %v1696 = vld [vmem:[%s1638 + $0x1c8] sm:$0xff]
        %v1697 = vld [vmem:[%s1638 + $0x1d0] sm:$0xff]
        %v1698 = vld [vmem:[%s1638 + $0x1d8] sm:$0xff]
        %v1699 = vld [vmem:[%s1638 + $0x1e0] sm:$0xff]
        %v1700 = vld [vmem:[%s1638 + $0x1e8] sm:$0xff]
        %v1701 = vld [vmem:[%s1638 + $0x1f0] sm:$0xff]
        %v1702 = vld [vmem:[%s1638 + $0x1f8] sm:$0xff]
        %v1707 = vrot.slane %v1634, 1
        %v1708 = vrot.slane %v1635, 1
        %v1709 = vrot.slane %v1636, 1
        %v1710 = vrot.slane %v1637, 1
        %v1779 = vunpack.c.l.b16 %v1639
        %v1780 = vunpack.c.h.b16 %v1639
        %v1781 = vunpack.c.l.b16 %v1640
        %v1782 = vunpack.c.h.b16 %v1640
        %v1783 = vunpack.c.l.b16 %v1641
        %v1784 = vunpack.c.h.b16 %v1641
        %v1785 = vunpack.c.l.b16 %v1642
        %v1786 = vunpack.c.h.b16 %v1642
        %v1787 = vunpack.c.l.b16 %v1643
        %v1788 = vunpack.c.h.b16 %v1643
        %v1789 = vunpack.c.l.b16 %v1644
        %v1790 = vunpack.c.h.b16 %v1644
        %v1791 = vunpack.c.l.b16 %v1645
        %v1792 = vunpack.c.h.b16 %v1645
        %v1793 = vunpack.c.l.b16 %v1646
        %v1794 = vunpack.c.h.b16 %v1646
        %v1795 = vunpack.c.l.b16 %v1647
        %v1796 = vunpack.c.h.b16 %v1647
        %v1797 = vunpack.c.l.b16 %v1648
        %v1798 = vunpack.c.h.b16 %v1648
        %v1799 = vunpack.c.l.b16 %v1649
        %v1800 = vunpack.c.h.b16 %v1649
        %v1801 = vunpack.c.l.b16 %v1650
        %v1802 = vunpack.c.h.b16 %v1650
        %v1803 = vunpack.c.l.b16 %v1651
        %v1804 = vunpack.c.h.b16 %v1651
        %v1805 = vunpack.c.l.b16 %v1652
        %v1806 = vunpack.c.h.b16 %v1652
        %v1807 = vunpack.c.l.b16 %v1653
        %v1808 = vunpack.c.h.b16 %v1653
        %v1809 = vunpack.c.l.b16 %v1654
        %v1810 = vunpack.c.h.b16 %v1654
        %v1811 = vunpack.c.l.b16 %v1655
        %v1812 = vunpack.c.h.b16 %v1655
        %v1813 = vunpack.c.l.b16 %v1656
        %v1814 = vunpack.c.h.b16 %v1656
        %v1815 = vunpack.c.l.b16 %v1657
        %v1816 = vunpack.c.h.b16 %v1657
        %v1817 = vunpack.c.l.b16 %v1658
        %v1818 = vunpack.c.h.b16 %v1658
        %v1819 = vunpack.c.l.b16 %v1659
        %v1820 = vunpack.c.h.b16 %v1659
        %v1821 = vunpack.c.l.b16 %v1660
        %v1822 = vunpack.c.h.b16 %v1660
        %v1823 = vunpack.c.l.b16 %v1661
        %v1824 = vunpack.c.h.b16 %v1661
        %v1825 = vunpack.c.l.b16 %v1662
        %v1826 = vunpack.c.h.b16 %v1662
        %v1827 = vunpack.c.l.b16 %v1663
        %v1828 = vunpack.c.h.b16 %v1663
        %v1829 = vunpack.c.l.b16 %v1664
        %v1830 = vunpack.c.h.b16 %v1664
        %v1831 = vunpack.c.l.b16 %v1665
        %v1832 = vunpack.c.h.b16 %v1665
        %v1833 = vunpack.c.l.b16 %v1666
        %v1834 = vunpack.c.h.b16 %v1666
        %v1835 = vunpack.c.l.b16 %v1667
        %v1836 = vunpack.c.h.b16 %v1667
        %v1837 = vunpack.c.l.b16 %v1668
        %v1838 = vunpack.c.h.b16 %v1668
        %v1839 = vunpack.c.l.b16 %v1669
        %v1840 = vunpack.c.h.b16 %v1669
        %v1841 = vunpack.c.l.b16 %v1670
        %v1842 = vunpack.c.h.b16 %v1670
        %v1843 = vunpack.c.l.b16 %v1671
        %v1844 = vunpack.c.h.b16 %v1671
        %v1845 = vunpack.c.l.b16 %v1672
        %v1846 = vunpack.c.h.b16 %v1672
        %v1847 = vunpack.c.l.b16 %v1673
        %v1848 = vunpack.c.h.b16 %v1673
        %v1849 = vunpack.c.l.b16 %v1674
        %v1850 = vunpack.c.h.b16 %v1674
        %v1851 = vunpack.c.l.b16 %v1675
        %v1852 = vunpack.c.h.b16 %v1675
        %v1853 = vunpack.c.l.b16 %v1676
        %v1854 = vunpack.c.h.b16 %v1676
        %v1855 = vunpack.c.l.b16 %v1677
        %v1856 = vunpack.c.h.b16 %v1677
        %v1857 = vunpack.c.l.b16 %v1678
        %v1858 = vunpack.c.h.b16 %v1678
        %v1859 = vunpack.c.l.b16 %v1679
        %v1860 = vunpack.c.h.b16 %v1679
        %v1861 = vunpack.c.l.b16 %v1680
        %v1862 = vunpack.c.h.b16 %v1680
        %v1863 = vunpack.c.l.b16 %v1681
        %v1864 = vunpack.c.h.b16 %v1681
        %v1865 = vunpack.c.l.b16 %v1682
        %v1866 = vunpack.c.h.b16 %v1682
        %v1867 = vunpack.c.l.b16 %v1683
        %v1868 = vunpack.c.h.b16 %v1683
        %v1869 = vunpack.c.l.b16 %v1684
        %v1870 = vunpack.c.h.b16 %v1684
        %v1871 = vunpack.c.l.b16 %v1685
        %v1872 = vunpack.c.h.b16 %v1685
        %v1873 = vunpack.c.l.b16 %v1686
        %v1874 = vunpack.c.h.b16 %v1686
        %v1875 = vunpack.c.l.b16 %v1687
        %v1876 = vunpack.c.h.b16 %v1687
        %v1877 = vunpack.c.l.b16 %v1688
        %v1878 = vunpack.c.h.b16 %v1688
        %v1879 = vunpack.c.l.b16 %v1689
        %v1880 = vunpack.c.h.b16 %v1689
        %v1881 = vunpack.c.l.b16 %v1690
        %v1882 = vunpack.c.h.b16 %v1690
        %v1883 = vunpack.c.l.b16 %v1691
        %v1884 = vunpack.c.h.b16 %v1691
        %v1885 = vunpack.c.l.b16 %v1692
        %v1886 = vunpack.c.h.b16 %v1692
        %v1887 = vunpack.c.l.b16 %v1693
        %v1888 = vunpack.c.h.b16 %v1693
        %v1889 = vunpack.c.l.b16 %v1694
        %v1890 = vunpack.c.h.b16 %v1694
        %v1891 = vunpack.c.l.b16 %v1695
        %v1892 = vunpack.c.h.b16 %v1695
        %v1893 = vunpack.c.l.b16 %v1696
        %v1894 = vunpack.c.h.b16 %v1696
        %v1895 = vunpack.c.l.b16 %v1697
        %v1896 = vunpack.c.h.b16 %v1697
        %v1897 = vunpack.c.l.b16 %v1698
        %v1898 = vunpack.c.h.b16 %v1698
        %v1899 = vunpack.c.l.b16 %v1699
        %v1900 = vunpack.c.h.b16 %v1699
        %v1901 = vunpack.c.l.b16 %v1700
        %v1902 = vunpack.c.h.b16 %v1700
        %v1903 = vunpack.c.l.b16 %v1701
        %v1904 = vunpack.c.h.b16 %v1701
        %v1905 = vunpack.c.l.b16 %v1702
        %v1906 = vunpack.c.h.b16 %v1702
        %v1907 = vpack.c.b16 %v1781, %v1779
        %v1908 = vpack.c.b16 %v1782, %v1780
        %v1909 = vpack.c.b16 %v1785, %v1783
        %v1910 = vpack.c.b16 %v1786, %v1784
        %v1911 = vpack.c.b16 %v1789, %v1787
        %v1912 = vpack.c.b16 %v1790, %v1788
        %v1913 = vpack.c.b16 %v1793, %v1791
        %v1914 = vpack.c.b16 %v1794, %v1792
        %v1915 = vpack.c.b16 %v1797, %v1795
        %v1916 = vpack.c.b16 %v1798, %v1796
        %v1917 = vpack.c.b16 %v1801, %v1799
        %v1918 = vpack.c.b16 %v1802, %v1800
        %v1919 = vpack.c.b16 %v1805, %v1803
        %v1920 = vpack.c.b16 %v1806, %v1804
        %v1921 = vpack.c.b16 %v1809, %v1807
        %v1922 = vpack.c.b16 %v1810, %v1808
        %v1923 = vpack.c.b16 %v1813, %v1811
        %v1924 = vpack.c.b16 %v1814, %v1812
        %v1925 = vpack.c.b16 %v1817, %v1815
        %v1926 = vpack.c.b16 %v1818, %v1816
        %v1927 = vpack.c.b16 %v1821, %v1819
        %v1928 = vpack.c.b16 %v1822, %v1820
        %v1929 = vpack.c.b16 %v1825, %v1823
        %v1930 = vpack.c.b16 %v1826, %v1824
        %v1931 = vpack.c.b16 %v1829, %v1827
        %v1932 = vpack.c.b16 %v1830, %v1828
        %v1933 = vpack.c.b16 %v1833, %v1831
        %v1934 = vpack.c.b16 %v1834, %v1832
        %v1935 = vpack.c.b16 %v1837, %v1835
        %v1936 = vpack.c.b16 %v1838, %v1836
        %v1937 = vpack.c.b16 %v1841, %v1839
        %v1938 = vpack.c.b16 %v1842, %v1840
        %v1939 = vpack.c.b16 %v1845, %v1843
        %v1940 = vpack.c.b16 %v1846, %v1844
        %v1941 = vpack.c.b16 %v1849, %v1847
        %v1942 = vpack.c.b16 %v1850, %v1848
        %v1943 = vpack.c.b16 %v1853, %v1851
        %v1944 = vpack.c.b16 %v1854, %v1852
        %v1945 = vpack.c.b16 %v1857, %v1855
        %v1946 = vpack.c.b16 %v1858, %v1856
        %v1947 = vpack.c.b16 %v1861, %v1859
        %v1948 = vpack.c.b16 %v1862, %v1860
        %v1949 = vpack.c.b16 %v1865, %v1863
        %v1950 = vpack.c.b16 %v1866, %v1864
        %v1951 = vpack.c.b16 %v1869, %v1867
        %v1952 = vpack.c.b16 %v1870, %v1868
        %v1953 = vpack.c.b16 %v1873, %v1871
        %v1954 = vpack.c.b16 %v1874, %v1872
        %v1955 = vpack.c.b16 %v1877, %v1875
        %v1956 = vpack.c.b16 %v1878, %v1876
        %v1957 = vpack.c.b16 %v1881, %v1879
        %v1958 = vpack.c.b16 %v1882, %v1880
        %v1959 = vpack.c.b16 %v1885, %v1883
        %v1960 = vpack.c.b16 %v1886, %v1884
        %v1961 = vpack.c.b16 %v1889, %v1887
        %v1962 = vpack.c.b16 %v1890, %v1888
        %v1963 = vpack.c.b16 %v1893, %v1891
        %v1964 = vpack.c.b16 %v1894, %v1892
        %v1965 = vpack.c.b16 %v1897, %v1895
        %v1966 = vpack.c.b16 %v1898, %v1896
        %v1967 = vpack.c.b16 %v1901, %v1899
        %v1968 = vpack.c.b16 %v1902, %v1900
        %v1969 = vpack.c.b16 %v1905, %v1903
        %v1970 = vpack.c.b16 %v1906, %v1904
        %2035 = vmatprep.subr.bf16.mxu0 %v1908
        %2036 = vmatpush1.bf16.msra.mxu0 %v1907
        %2037 = vmatprep.subr.bf16.mxu0 %v1910
        %2038 = vmatpush1.bf16.msra.mxu0 %v1909
        %2039 = vmatprep.subr.bf16.mxu0 %v1912
        %2040 = vmatpush1.bf16.msra.mxu0 %v1911
        %2041 = vmatprep.subr.bf16.mxu0 %v1914
        %2042 = vmatpush1.bf16.msra.mxu0 %v1913
        %2043 = vmatprep.subr.bf16.mxu0 %v1916
        %2044 = vmatpush1.bf16.msra.mxu0 %v1915
        %2045 = vmatprep.subr.bf16.mxu0 %v1918
        %2046 = vmatpush1.bf16.msra.mxu0 %v1917
        %2047 = vmatprep.subr.bf16.mxu0 %v1920
        %2048 = vmatpush1.bf16.msra.mxu0 %v1919
        %2049 = vmatprep.subr.bf16.mxu0 %v1922
        %2050 = vmatpush1.bf16.msra.mxu0 %v1921
        %2051 = vmatprep.subr.bf16.mxu0 %v1924
        %2052 = vmatpush1.bf16.msra.mxu0 %v1923
        %2053 = vmatprep.subr.bf16.mxu0 %v1926
        %2054 = vmatpush1.bf16.msra.mxu0 %v1925
        %2055 = vmatprep.subr.bf16.mxu0 %v1928
        %2056 = vmatpush1.bf16.msra.mxu0 %v1927
        %2057 = vmatprep.subr.bf16.mxu0 %v1930
        %2058 = vmatpush1.bf16.msra.mxu0 %v1929
        %2059 = vmatprep.subr.bf16.mxu0 %v1932
        %2060 = vmatpush1.bf16.msra.mxu0 %v1931
        %2061 = vmatprep.subr.bf16.mxu0 %v1934
        %2062 = vmatpush1.bf16.msra.mxu0 %v1933
        %2063 = vmatprep.subr.bf16.mxu0 %v1936
        %2064 = vmatpush1.bf16.msra.mxu0 %v1935
        %2065 = vmatprep.subr.bf16.mxu0 %v1938
        %2066 = vmatpush1.bf16.msra.mxu0 %v1937
        %2067 = vmatprep.mubr.bf16.mxu0 %v1708
        %2068 = vmatmul.mubr.bf16.gmra.mrb[0].mxu0 %v1707
        %v2069 = vpop.f32.mrb[0].mxu0
        %v2070 = vadd.f32 0.0, %v2069
        %v2071 = vpop.f32.mrb[0].mxu0
        %v2072 = vadd.f32 0.0, %v2071
        %v2073 = vpop.f32.mrb[0].mxu0
        %v2074 = vpop.f32.mrb[0].mxu0
        %2075 = vdwg.mxu0
        %2076 = vmatprep.subr.bf16.mxu0 %v1940
        %2077 = vmatpush1.bf16.msra.mxu0 %v1939
        %2078 = vmatprep.subr.bf16.mxu0 %v1942
        %2079 = vmatpush1.bf16.msra.mxu0 %v1941
        %2080 = vmatprep.subr.bf16.mxu0 %v1944
        %2081 = vmatpush1.bf16.msra.mxu0 %v1943
        %2082 = vmatprep.subr.bf16.mxu0 %v1946
        %2083 = vmatpush1.bf16.msra.mxu0 %v1945
        %2084 = vmatprep.subr.bf16.mxu0 %v1948
        %2085 = vmatpush1.bf16.msra.mxu0 %v1947
        %2086 = vmatprep.subr.bf16.mxu0 %v1950
        %2087 = vmatpush1.bf16.msra.mxu0 %v1949
        %2088 = vmatprep.subr.bf16.mxu0 %v1952
        %2089 = vmatpush1.bf16.msra.mxu0 %v1951
        %2090 = vmatprep.subr.bf16.mxu0 %v1954
        %2091 = vmatpush1.bf16.msra.mxu0 %v1953
        %2092 = vmatprep.subr.bf16.mxu0 %v1956
        %2093 = vmatpush1.bf16.msra.mxu0 %v1955
        %2094 = vmatprep.subr.bf16.mxu0 %v1958
        %2095 = vmatpush1.bf16.msra.mxu0 %v1957
        %2096 = vmatprep.subr.bf16.mxu0 %v1960
        %2097 = vmatpush1.bf16.msra.mxu0 %v1959
        %2098 = vmatprep.subr.bf16.mxu0 %v1962
        %2099 = vmatpush1.bf16.msra.mxu0 %v1961
        %2100 = vmatprep.subr.bf16.mxu0 %v1964
        %2101 = vmatpush1.bf16.msra.mxu0 %v1963
        %2102 = vmatprep.subr.bf16.mxu0 %v1966
        %2103 = vmatpush1.bf16.msra.mxu0 %v1965
        %2104 = vmatprep.subr.bf16.mxu0 %v1968
        %2105 = vmatpush1.bf16.msra.mxu0 %v1967
        %2106 = vmatprep.subr.bf16.mxu0 %v1970
        %2107 = vmatpush1.bf16.msra.mxu0 %v1969
        %2108 = vmatprep.mubr.bf16.mxu0 %v1710
        %2109 = vmatmul.mubr.bf16.gmra.mrb[0].mxu0 %v1709
        %v2110 = vpop.f32.mrb[0].mxu0
        %v2111 = vadd.f32 %v2070, %v2110
        %v2112 = vpop.f32.mrb[0].mxu0
        %v2113 = vadd.f32 %v2072, %v2112
        %v2114 = vpop.f32.mrb[0].mxu0
        %v2115 = vpop.f32.mrb[0].mxu0
        %2116 = vdwg.mxu0
        %v2117 = vadd.f32 %v1620, %v2111
        %v2118 = vadd.f32 %v1622, %v2113
        %v2119 = vld [vmem:[%s4] sm:$0x3]
        %v2121 = vlaneseq
        %v2122 = vshrl.u32 %v2121, 7
        %v2123 = vsub.s32 0, %v2122
        %v2124 = vrot.slane %v2119, %v2123
        %v2125 = vlaneseq
        %v2126 = vshrl.u32 %v2125, 7
        %v2127 = vsub.s32 1, %v2126
        %v2128 = vrot.slane %v2119, %v2127
        %v2131 = vadd.f32 %v2117, %v2124
        %v2132 = vadd.f32 %v2118, %v2128
        %v2133 = vmax.f32 %v2131, 0.0
        %v2134 = vmax.f32 %v2132, 0.0
        %v2135 = vmax.f32 %v2133, %v2134
        %v2136 = vpack.c.bf16 %v2135, %v2135
        %2137 = vst [vmem:[%s234] sm:$0xf] %v2136
        %p2138 = scmp.lt.s32.totalorder %s17, 1
        %s2139 = scalar_select %p2138, %s17, 1
        %s2140 = smul.addr %s2139, 4
        %s2141 = scalar_lea.vmem %s5, %s2140
        // Predicated region
        $region45: #{promoter_cnn_forward.2} parent=39 // pred_check
          %p2142 = pneg %p145
        $region46: #{promoter_cnn_forward.2} parent=39 // pred_check_branch
          %2144 = sbr.rel (%p2142) target = $region48
        $region47: #{promoter_cnn_forward.2} parent=39 // pred_region
          _
        $region48: #{promoter_cnn_forward.2} parent=39 // pred_fallthru
          _
      $region40: #{promoter_cnn_forward.2} parent=5 // pred_fallthru
        _
      %p2145 = scmp.le.s32.totalorder 2, %s12
      // Predicated region
      $region49: #{promoter_cnn_forward.2} parent=5 // pred_check
        %p2146 = pneg %p2145
      $region50: #{promoter_cnn_forward.2} parent=5 // pred_check_branch
        %2148 = sbr.rel (%p2146) target = $region52
      $region51: #{promoter_cnn_forward.2} parent=5 // pred_region
        %s2149 = ssub.s32 %s12, 2
        // Predicated region
        $region53: #{promoter_cnn_forward.2} parent=51 // pred_check
          %p2150 = pneg %p151
        $region54: #{promoter_cnn_forward.2} parent=51 // pred_check_branch
          %2152 = sbr.rel (%p2150) target = $region56
        $region55: #{promoter_cnn_forward.2} parent=51 // pred_region
          %p2153 = scmp.lt.s32.totalorder %s18, 1
          %s2154 = scalar_select %p2153, %s18, 1
          %s2155 = smul.addr %s2154, 4
          %s2156 = scalar_lea.vmem %s5, %s2155
        $region56: #{promoter_cnn_forward.2} parent=51 // pred_fallthru
          _
      $region52: #{promoter_cnn_forward.2} parent=5 // pred_fallthru
        _
    $region6: #{promoter_cnn_forward.2} parent=1 // loop_footer
      %s16 = sadd.s32 1, %s12
    $region7: #{promoter_cnn_forward.2} parent=1 // loop_footer_branch
      %11 = sbr.rel target = $region3
    $region8: #{promoter_cnn_forward.2} parent=1 // loop_exit
      _
    %2157 = vsyncpa [#allocation4], 1
    %s2158 = scalar_lea.sflag [#allocation4], 1
    %2159 = vsyncpa %s2158, 1

</llo_original>
